<compile_context>
chip_gen: v7x
topology: tpu7x:2x2x1
jax: 0.10.0
libtpu: 0.0.40
codegen_flags: <defaults>
</compile_context>

<pallas_src>
import functools
import math

import jax
import jax.numpy as jnp
from jax import lax
from jax.experimental import pallas as pl
from jax.experimental.pallas import tpu as pltpu


def _relu(x):
    return jnp.maximum(x, 0.0)


def spatial_attention_kernel(x_ref, ste_ref, mask_ref, wqkv_ref, bqkv_ref,
                             w1_ref, b1_ref, w2_ref, b2_ref, o_ref,
                             *, num_heads, head_dim, tile_rows):
    D = num_heads * head_dim
    rows = x_ref.shape[0]            # rows in this grid block (static)
    n_tiles = rows // tile_rows      # attention tiles per block (static)

    @pl.loop(0, n_tiles)
    def _(t):
        r0 = pl.multiple_of(t * tile_rows, tile_rows)
        rs = pl.ds(r0, tile_rows)

        # Fused relu'd Q|K|V projection: concat(X, STE) exists only in VMEM,
        # single K=2D contraction, output columns padded to 128 lanes.
        xs = jnp.concatenate([x_ref[rs, :], ste_ref[rs, :]], axis=-1)
        qkv = jnp.dot(xs, wqkv_ref[...], preferred_element_type=jnp.float32)
        qkv = _relu(qkv + bqkv_ref[...])          # [tile_rows, >=128]

        # Block-dense masked attention: one [tile_rows, d] x [tile_rows, d]^T
        # score matmul per head; the additive block-diagonal mask keeps
        # attention within each (b, t) slab; softmax is lane-dense over
        # tile_rows keys.  1/sqrt(d) is already folded into the Q columns.
        heads = []
        for h in range(num_heads):    # static unroll; head count is small here
            lo = h * head_dim
            qh = qkv[:, lo:lo + head_dim]
            kh = qkv[:, D + lo:D + lo + head_dim]
            vh = qkv[:, 2 * D + lo:2 * D + lo + head_dim]
            s = lax.dot_general(qh, kh, (((1,), (1,)), ((), ())),
                                preferred_element_type=jnp.float32)
            s = s + mask_ref[...]                       # [tile_rows, tile_rows]
            m = jnp.max(s, axis=-1, keepdims=True)
            p = jnp.exp(s - m)
            # approx=True (EUP vrcp) is a further option; kept exact so the
            # 2e-4 f32 correctness check below holds.
            p = p * pl.reciprocal(jnp.sum(p, axis=-1, keepdims=True),
                                  approx=False)
            heads.append(jnp.dot(p, vh, preferred_element_type=jnp.float32))

        # One full-K W1 matmul on the lane-concat of head outputs.
        o_att = jnp.concatenate(heads, axis=-1)         # [tile_rows, D]
        h1 = _relu(jnp.dot(o_att, w1_ref[...],
                           preferred_element_type=jnp.float32) + b1_ref[...])
        out = jnp.dot(h1, w2_ref[...],
                      preferred_element_type=jnp.float32) + b2_ref[...]
        o_ref[rs, :] = out.astype(o_ref.dtype)


def _choose_blocking(num_slabs, num_nodes, *, target_rows=1024, min_grid=4):
    """Pick (slabs-per-attention-tile, tiles-per-block, tile_rows).

    * attention tile packs slabs until the key axis is 128 lanes (when N
      divides 128), else one slab per tile;
    * block rows are a multiple of the tile AND of 8 (BlockSpec constraint) —
      never falls back to the whole B*T axis;
    * block rows bounded by ~target_rows, and >= min_grid grid steps are kept
      when the problem is large enough (v7x: both TensorCores busy).
    """
    if num_nodes < 128 and 128 % num_nodes == 0:
        sub = 128 // num_nodes
    else:
        sub = 1
    tile_rows = sub * num_nodes
    m8 = 8 // math.gcd(tile_rows, 8)          # tiles needed for 8-row alignment
    cap_rows = max(1, target_rows // (tile_rows * m8))
    cap_grid = max(1, num_slabs // (min_grid * sub * m8))
    g = m8 * max(1, min(cap_rows, cap_grid))  # attention tiles per grid block
    return sub, g, tile_rows


def spatial_attention(X, STE, params, *, num_heads, head_dim):
    B, T, N, D = X.shape
    assert D == num_heads * head_dim
    BT = B * T
    n_rows = BT * N

    sub, g, tile_rows = _choose_blocking(BT, N)
    tb = sub * g                     # (b, t) slabs per grid block
    rows_blk = g * tile_rows         # rows per grid block (8-aligned)
    grid = -(-BT // tb)              # ceil
    pad_slabs = grid * tb - BT

    wq, bq, wk, bk, wv, bv, w1, b1, w2, b2 = params
    scale = 1.0 / math.sqrt(head_dim)

    # Fused Q|K|V weight with the softmax scale folded into Q; pad the 3D
    # output columns up to a multiple of 128 lanes.
    w_qkv = jnp.concatenate([wq * scale, wk, wv], axis=1)    # [2D, 3D]
    b_qkv = jnp.concatenate([bq * scale, bk, bv], axis=1)    # [1, 3D]
    cols = 3 * D
    cols_p = max(128, -(-cols // 128) * 128)
    if cols_p != cols:
        w_qkv = jnp.pad(w_qkv, ((0, 0), (0, cols_p - cols)))
        b_qkv = jnp.pad(b_qkv, ((0, 0), (0, cols_p - cols)))

    X2 = X.reshape(n_rows, D)
    STE2 = STE.reshape(n_rows, D)
    if pad_slabs:
        X2 = jnp.pad(X2, ((0, pad_slabs * N), (0, 0)))
        STE2 = jnp.pad(STE2, ((0, pad_slabs * N), (0, 0)))
    n_rows_p = grid * rows_blk

    # Additive block-diagonal mask: queries only see keys of their own slab.
    slab_id = jnp.arange(tile_rows, dtype=jnp.int32) // N
    mask = jnp.where(slab_id[:, None] == slab_id[None, :], 0.0, -1e30)
    mask = mask.astype(jnp.float32)

    kernel = functools.partial(spatial_attention_kernel,
                               num_heads=num_heads, head_dim=head_dim,
                               tile_rows=tile_rows)

    out = pl.pallas_call(
        kernel,
        out_shape=jax.ShapeDtypeStruct((n_rows_p, D), jnp.float32),
        grid_spec=pltpu.PrefetchScalarGridSpec(
            num_scalar_prefetch=0,
            grid=(grid,),
            in_specs=[
                pl.BlockSpec((rows_blk, D), lambda i: (i, 0)),           # X rows
                pl.BlockSpec((rows_blk, D), lambda i: (i, 0)),           # STE rows
                pl.BlockSpec((tile_rows, tile_rows), lambda i: (0, 0)),  # mask
                pl.BlockSpec((2 * D, cols_p), lambda i: (0, 0)),         # W_qkv
                pl.BlockSpec((1, cols_p), lambda i: (0, 0)),             # b_qkv
                pl.BlockSpec((D, D), lambda i: (0, 0)),                  # W1
                pl.BlockSpec((1, D), lambda i: (0, 0)),                  # b1
                pl.BlockSpec((D, D), lambda i: (0, 0)),                  # W2
                pl.BlockSpec((1, D), lambda i: (0, 0)),                  # b2
            ],
            out_specs=pl.BlockSpec((rows_blk, D), lambda i: (i, 0)),
        ),
        compiler_params=pltpu.CompilerParams(
            dimension_semantics=("parallel",),
            vmem_limit_bytes=32 * 1024 * 1024),
    )(X2, STE2, mask, w_qkv, b_qkv, w1, b1, w2, b2)

    return out[:n_rows].reshape(B, T, N, D)


def reference_forward(X, STE, params, *, num_heads, head_dim):
    """Pure-JAX reference (same math as the PyTorch module)."""
    wq, bq, wk, bk, wv, bv, w1, b1, w2, b2 = params
    B, T, N, D = X.shape
    Xc = jnp.concatenate([X, STE], axis=-1)
    q = _relu(Xc @ wq + bq[0])
    k = _relu(Xc @ wk + bk[0])
    v = _relu(Xc @ wv + bv[0])
    qh = q.reshape(B, T, N, num_heads, head_dim)
    kh = k.reshape(B, T, N, num_heads, head_dim)
    vh = v.reshape(B, T, N, num_heads, head_dim)
    s = jnp.einsum('btnkd,btmkd->btknm', qh, kh) / math.sqrt(head_dim)
    p = jax.nn.softmax(s, axis=-1)
    o = jnp.einsum('btknm,btmkd->btnkd', p, vh).reshape(B, T, N, D)
    h1 = _relu(o @ w1 + b1[0])
    return h1 @ w2 + b2[0]


def init_params(key, x_dim, D):
    """Deterministic FC weights (1x1-conv equivalents)."""
    ks = jax.random.split(key, 10)

    def lin(kw, kb, fan_in, fan_out):
        w = jax.random.normal(kw, (fan_in, fan_out), jnp.float32) / math.sqrt(fan_in)
        b = 0.01 * jax.random.normal(kb, (1, fan_out), jnp.float32)
        return w, b

    wq, bq = lin(ks[0], ks[1], x_dim, D)
    wk, bk = lin(ks[2], ks[3], x_dim, D)
    wv, bv = lin(ks[4], ks[5], x_dim, D)
    w1, b1 = lin(ks[6], ks[7], D, D)
    w2, b2 = lin(ks[8], ks[9], D, D)
    return (wq, bq, wk, bk, wv, bv, w1, b1, w2, b2)


if __name__ == "__main__":
    B, T, N = 2, 32, 8         # batch, num_step, nodes  (B*T = 64 slabs)
    K, d = 2, 16               # heads, head dim
    D = K * d                  # 32
    x_dim = 2 * D              # input dim after concat(X, STE)

    key = jax.random.PRNGKey(0)
    kx, ks, kp = jax.random.split(key, 3)
    X = jax.random.normal(kx, (B, T, N, D), jnp.float32)
    STE = jax.random.normal(ks, (B, T, N, D), jnp.float32)
    params = init_params(kp, x_dim, D)

    out = spatial_attention(X, STE, params, num_heads=K, head_dim=d)
    out = jax.block_until_ready(out)

    ref = reference_forward(X, STE, params, num_heads=K, head_dim=d)
    assert out.shape == (B, T, N, D)
    assert jnp.allclose(out, ref, rtol=2e-4, atol=2e-4), "mismatch vs reference"

    print("KERNEL_OK")
</pallas_src>

<mosaic_0001>
module attributes {stable_mosaic.version = 11 : i64} {
  func.func @spatial_attention_kernel(%arg0: i32, %arg1: memref<128x32xf32, #tpu.memory_space<vmem>>, %arg2: memref<128x32xf32, #tpu.memory_space<vmem>>, %arg3: memref<128x128xf32, #tpu.memory_space<vmem>>, %arg4: memref<64x128xf32, #tpu.memory_space<vmem>>, %arg5: memref<1x128xf32, #tpu.memory_space<vmem>>, %arg6: memref<32x32xf32, #tpu.memory_space<vmem>>, %arg7: memref<1x32xf32, #tpu.memory_space<vmem>>, %arg8: memref<32x32xf32, #tpu.memory_space<vmem>>, %arg9: memref<1x32xf32, #tpu.memory_space<vmem>>, %arg10: memref<128x32xf32, #tpu.memory_space<vmem>>) attributes {dimension_semantics = [#tpu.dimension_semantics<parallel>], iteration_bounds = array<i64: 4>, scalar_prefetch = 0 : i64, scratch_operands = 0 : i64, tpu.core_type = #tpu.core_type<tc>, window_params = [{transform_indices = @transform_0, window_bounds = array<i64: 128, 32>}, {transform_indices = @transform_1, window_bounds = array<i64: 128, 32>}, {pipeline_mode = #tpu.pipeline_mode<synchronous>, transform_indices = @transform_2, window_bounds = array<i64: 128, 128>}, {pipeline_mode = #tpu.pipeline_mode<synchronous>, transform_indices = @transform_3, window_bounds = array<i64: 64, 128>}, {pipeline_mode = #tpu.pipeline_mode<synchronous>, transform_indices = @transform_4, window_bounds = array<i64: 1, 128>}, {pipeline_mode = #tpu.pipeline_mode<synchronous>, transform_indices = @transform_5, window_bounds = array<i64: 32, 32>}, {pipeline_mode = #tpu.pipeline_mode<synchronous>, transform_indices = @transform_6, window_bounds = array<i64: 1, 32>}, {pipeline_mode = #tpu.pipeline_mode<synchronous>, transform_indices = @transform_7, window_bounds = array<i64: 32, 32>}, {pipeline_mode = #tpu.pipeline_mode<synchronous>, transform_indices = @transform_8, window_bounds = array<i64: 1, 32>}, {transform_indices = @transform_9, window_bounds = array<i64: 128, 32>}]} {
    %c0_i32 = arith.constant 0 : i32
    %c1_i32 = arith.constant 1 : i32
    %0 = arith.muli %c0_i32, %c1_i32 : i32
    %c0_i32_0 = arith.constant 0 : i32
    %1 = arith.addi %c0_i32_0, %0 : i32
    %c128_i32 = arith.constant 128 : i32
    %2 = arith.muli %1, %c128_i32 : i32
    %3 = tpu.assume_multiple %2, 128 : i32
    %4 = arith.index_cast %3 : i32 to index
    %c0 = arith.constant 0 : index
    %5 = vector.load %arg1[%4, %c0] : memref<128x32xf32, #tpu.memory_space<vmem>>, vector<128x32xf32>
    %6 = arith.index_cast %3 : i32 to index
    %c0_1 = arith.constant 0 : index
    %7 = vector.load %arg2[%6, %c0_1] : memref<128x32xf32, #tpu.memory_space<vmem>>, vector<128x32xf32>
    %8 = tpu.concatenate %5, %7 in 1 : vector<128x32xf32>, vector<128x32xf32> -> vector<128x64xf32>
    %c0_2 = arith.constant 0 : index
    %c0_3 = arith.constant 0 : index
    %9 = vector.load %arg4[%c0_2, %c0_3] : memref<64x128xf32, #tpu.memory_space<vmem>>, vector<64x128xf32>
    %cst = arith.constant dense<0.000000e+00> : vector<128x128xf32>
    %10 = tpu.matmul %8, %9, %cst {dimension_numbers = #tpu.dot_dimension_numbers<[1], [0], [0], [1], [0, 0, 1, 1], [], []>} : vector<128x64xf32>, vector<64x128xf32>, vector<128x128xf32> -> vector<128x128xf32>
    %c0_4 = arith.constant 0 : index
    %c0_5 = arith.constant 0 : index
    %11 = vector.load %arg5[%c0_4, %c0_5] : memref<1x128xf32, #tpu.memory_space<vmem>>, vector<1x128xf32>
    %12 = vector.broadcast %11 : vector<1x128xf32> to vector<128x128xf32>
    %13 = arith.addf %10, %12 : vector<128x128xf32>
    %cst_6 = arith.constant 0.000000e+00 : f32
    %14 = vector.broadcast %cst_6 : f32 to vector<128x128xf32>
    %15 = arith.maximumf %13, %14 : vector<128x128xf32>
    %16 = vector.extract_strided_slice %15 {offsets = [0, 0], sizes = [128, 16], strides = [1, 1]} : vector<128x128xf32> to vector<128x16xf32>
    %17 = vector.extract_strided_slice %15 {offsets = [0, 32], sizes = [128, 16], strides = [1, 1]} : vector<128x128xf32> to vector<128x16xf32>
    %18 = vector.extract_strided_slice %15 {offsets = [0, 64], sizes = [128, 16], strides = [1, 1]} : vector<128x128xf32> to vector<128x16xf32>
    %cst_7 = arith.constant dense<0.000000e+00> : vector<128x128xf32>
    %19 = tpu.matmul %16, %17, %cst_7 {dimension_numbers = #tpu.dot_dimension_numbers<[1], [1], [0], [0], [0, 0, 1, 0], [], []>} : vector<128x16xf32>, vector<128x16xf32>, vector<128x128xf32> -> vector<128x128xf32>
    %c0_8 = arith.constant 0 : index
    %c0_9 = arith.constant 0 : index
    %20 = vector.load %arg3[%c0_8, %c0_9] : memref<128x128xf32, #tpu.memory_space<vmem>>, vector<128x128xf32>
    %21 = arith.addf %19, %20 : vector<128x128xf32>
    %cst_10 = arith.constant dense<0xFF800000> : vector<128xf32>
    %22 = vector.multi_reduction <maximumf>, %21, %cst_10 [1] : vector<128x128xf32> to vector<128xf32>
    %23 = vector.shape_cast %22 : vector<128xf32> to vector<128x1xf32>
    %24 = vector.broadcast %23 : vector<128x1xf32> to vector<128x128xf32>
    %25 = arith.subf %21, %24 : vector<128x128xf32>
    %26 = math.exp %25 : vector<128x128xf32>
    %cst_11 = arith.constant dense<0.000000e+00> : vector<128xf32>
    %27 = vector.multi_reduction <add>, %26, %cst_11 [1] : vector<128x128xf32> to vector<128xf32>
    %28 = vector.shape_cast %27 : vector<128xf32> to vector<128x1xf32>
    %29 = tpu.reciprocal %28 : vector<128x1xf32> -> vector<128x1xf32>
    %30 = vector.broadcast %29 : vector<128x1xf32> to vector<128x128xf32>
    %31 = arith.mulf %26, %30 : vector<128x128xf32>
    %cst_12 = arith.constant dense<0.000000e+00> : vector<128x16xf32>
    %32 = tpu.matmul %31, %18, %cst_12 {dimension_numbers = #tpu.dot_dimension_numbers<[1], [0], [0], [1], [0, 0, 1, 1], [], []>} : vector<128x128xf32>, vector<128x16xf32>, vector<128x16xf32> -> vector<128x16xf32>
    %33 = vector.extract_strided_slice %15 {offsets = [0, 16], sizes = [128, 16], strides = [1, 1]} : vector<128x128xf32> to vector<128x16xf32>
    %34 = vector.extract_strided_slice %15 {offsets = [0, 48], sizes = [128, 16], strides = [1, 1]} : vector<128x128xf32> to vector<128x16xf32>
    %35 = vector.extract_strided_slice %15 {offsets = [0, 80], sizes = [128, 16], strides = [1, 1]} : vector<128x128xf32> to vector<128x16xf32>
    %cst_13 = arith.constant dense<0.000000e+00> : vector<128x128xf32>
    %36 = tpu.matmul %33, %34, %cst_13 {dimension_numbers = #tpu.dot_dimension_numbers<[1], [1], [0], [0], [0, 0, 1, 0], [], []>} : vector<128x16xf32>, vector<128x16xf32>, vector<128x128xf32> -> vector<128x128xf32>
    %c0_14 = arith.constant 0 : index
    %c0_15 = arith.constant 0 : index
    %37 = vector.load %arg3[%c0_14, %c0_15] : memref<128x128xf32, #tpu.memory_space<vmem>>, vector<128x128xf32>
    %38 = arith.addf %36, %37 : vector<128x128xf32>
    %cst_16 = arith.constant dense<0xFF800000> : vector<128xf32>
    %39 = vector.multi_reduction <maximumf>, %38, %cst_16 [1] : vector<128x128xf32> to vector<128xf32>
    %40 = vector.shape_cast %39 : vector<128xf32> to vector<128x1xf32>
    %41 = vector.broadcast %40 : vector<128x1xf32> to vector<128x128xf32>
    %42 = arith.subf %38, %41 : vector<128x128xf32>
    %43 = math.exp %42 : vector<128x128xf32>
    %cst_17 = arith.constant dense<0.000000e+00> : vector<128xf32>
    %44 = vector.multi_reduction <add>, %43, %cst_17 [1] : vector<128x128xf32> to vector<128xf32>
    %45 = vector.shape_cast %44 : vector<128xf32> to vector<128x1xf32>
    %46 = tpu.reciprocal %45 : vector<128x1xf32> -> vector<128x1xf32>
    %47 = vector.broadcast %46 : vector<128x1xf32> to vector<128x128xf32>
    %48 = arith.mulf %43, %47 : vector<128x128xf32>
    %cst_18 = arith.constant dense<0.000000e+00> : vector<128x16xf32>
    %49 = tpu.matmul %48, %35, %cst_18 {dimension_numbers = #tpu.dot_dimension_numbers<[1], [0], [0], [1], [0, 0, 1, 1], [], []>} : vector<128x128xf32>, vector<128x16xf32>, vector<128x16xf32> -> vector<128x16xf32>
    %50 = tpu.concatenate %32, %49 in 1 : vector<128x16xf32>, vector<128x16xf32> -> vector<128x32xf32>
    %c0_19 = arith.constant 0 : index
    %c0_20 = arith.constant 0 : index
    %51 = vector.load %arg6[%c0_19, %c0_20] : memref<32x32xf32, #tpu.memory_space<vmem>>, vector<32x32xf32>
    %cst_21 = arith.constant dense<0.000000e+00> : vector<128x32xf32>
    %52 = tpu.matmul %50, %51, %cst_21 {dimension_numbers = #tpu.dot_dimension_numbers<[1], [0], [0], [1], [0, 0, 1, 1], [], []>} : vector<128x32xf32>, vector<32x32xf32>, vector<128x32xf32> -> vector<128x32xf32>
    %c0_22 = arith.constant 0 : index
    %c0_23 = arith.constant 0 : index
    %53 = vector.load %arg7[%c0_22, %c0_23] : memref<1x32xf32, #tpu.memory_space<vmem>>, vector<1x32xf32>
    %54 = vector.broadcast %53 : vector<1x32xf32> to vector<128x32xf32>
    %55 = arith.addf %52, %54 : vector<128x32xf32>
    %cst_24 = arith.constant 0.000000e+00 : f32
    %56 = vector.broadcast %cst_24 : f32 to vector<128x32xf32>
    %57 = arith.maximumf %55, %56 : vector<128x32xf32>
    %c0_25 = arith.constant 0 : index
    %c0_26 = arith.constant 0 : index
    %58 = vector.load %arg8[%c0_25, %c0_26] : memref<32x32xf32, #tpu.memory_space<vmem>>, vector<32x32xf32>
    %cst_27 = arith.constant dense<0.000000e+00> : vector<128x32xf32>
    %59 = tpu.matmul %57, %58, %cst_27 {dimension_numbers = #tpu.dot_dimension_numbers<[1], [0], [0], [1], [0, 0, 1, 1], [], []>} : vector<128x32xf32>, vector<32x32xf32>, vector<128x32xf32> -> vector<128x32xf32>
    %c0_28 = arith.constant 0 : index
    %c0_29 = arith.constant 0 : index
    %60 = vector.load %arg9[%c0_28, %c0_29] : memref<1x32xf32, #tpu.memory_space<vmem>>, vector<1x32xf32>
    %61 = vector.broadcast %60 : vector<1x32xf32> to vector<128x32xf32>
    %62 = arith.addf %59, %61 : vector<128x32xf32>
    %63 = arith.index_cast %3 : i32 to index
    %c0_30 = arith.constant 0 : index
    %64 = vector.load %arg10[%63, %c0_30] : memref<128x32xf32, #tpu.memory_space<vmem>>, vector<128x32xf32>
    tpu.vector_store %arg10[%63, %c0_30], %62 {strides = array<i32>} : memref<128x32xf32, #tpu.memory_space<vmem>>, vector<128x32xf32>,
    %c1_i32_31 = arith.constant 1 : i32
    return
  }
  func.func @transform_0(%arg0: i32) -> (i32, i32) {
    %c0_i32 = arith.constant 0 : i32
    %c0_i32_0 = arith.constant 0 : i32
    return %arg0, %c0_i32 : i32, i32
  }
  func.func @transform_1(%arg0: i32) -> (i32, i32) {
    %c0_i32 = arith.constant 0 : i32
    %c0_i32_0 = arith.constant 0 : i32
    return %arg0, %c0_i32 : i32, i32
  }
  func.func @transform_2(%arg0: i32) -> (i32, i32) {
    %c0_i32 = arith.constant 0 : i32
    %c0_i32_0 = arith.constant 0 : i32
    %c0_i32_1 = arith.constant 0 : i32
    return %c0_i32, %c0_i32_0 : i32, i32
  }
  func.func @transform_3(%arg0: i32) -> (i32, i32) {
    %c0_i32 = arith.constant 0 : i32
    %c0_i32_0 = arith.constant 0 : i32
    %c0_i32_1 = arith.constant 0 : i32
    return %c0_i32, %c0_i32_0 : i32, i32
  }
  func.func @transform_4(%arg0: i32) -> (i32, i32) {
    %c0_i32 = arith.constant 0 : i32
    %c0_i32_0 = arith.constant 0 : i32
    %c0_i32_1 = arith.constant 0 : i32
    return %c0_i32, %c0_i32_0 : i32, i32
  }
  func.func @transform_5(%arg0: i32) -> (i32, i32) {
    %c0_i32 = arith.constant 0 : i32
    %c0_i32_0 = arith.constant 0 : i32
    %c0_i32_1 = arith.constant 0 : i32
    return %c0_i32, %c0_i32_0 : i32, i32
  }
  func.func @transform_6(%arg0: i32) -> (i32, i32) {
    %c0_i32 = arith.constant 0 : i32
    %c0_i32_0 = arith.constant 0 : i32
    %c0_i32_1 = arith.constant 0 : i32
    return %c0_i32, %c0_i32_0 : i32, i32
  }
  func.func @transform_7(%arg0: i32) -> (i32, i32) {
    %c0_i32 = arith.constant 0 : i32
    %c0_i32_0 = arith.constant 0 : i32
    %c0_i32_1 = arith.constant 0 : i32
    return %c0_i32, %c0_i32_0 : i32, i32
  }
  func.func @transform_8(%arg0: i32) -> (i32, i32) {
    %c0_i32 = arith.constant 0 : i32
    %c0_i32_0 = arith.constant 0 : i32
    %c0_i32_1 = arith.constant 0 : i32
    return %c0_i32, %c0_i32_0 : i32, i32
  }
  func.func @transform_9(%arg0: i32) -> (i32, i32) {
    %c0_i32 = arith.constant 0 : i32
    %c0_i32_0 = arith.constant 0 : i32
    return %arg0, %c0_i32 : i32, i32
  }
}

</mosaic_0001>

<llo_original>
// kernel: tpu_custom_call.1
$region0: #{tpu_custom_call.1}
  #allocation0 [shape = 'u32[]', space=smem, size = 0x4, offset = 0x4, fixed_abs, tag = 'smem constant byte address 0x4 - core index']
  #allocation1 [shape = 'u32[144,128]{1,0:T(1,128)}', space=vmem, size = 0x12000, scoped, tag = 'internal scratch']
  %s0 = inlined_call_operand.vmem [shape: f32[512,32], index: 0, kind: input, shape index: {}]
  %s1 = inlined_call_operand.vmem [shape: f32[512,32], index: 1, kind: input, shape index: {}]
  %s2 = inlined_call_operand.vmem [shape: f32[128,128], index: 2, kind: input, shape index: {}]
  %s3 = inlined_call_operand.vmem [shape: f32[64,128], index: 3, kind: input, shape index: {}]
  %s4 = inlined_call_operand.vmem [shape: f32[1,128], index: 4, kind: input, shape index: {}]
  %s5 = inlined_call_operand.vmem [shape: f32[32,32], index: 5, kind: input, shape index: {}]
  %s6 = inlined_call_operand.vmem [shape: f32[1,32], index: 6, kind: input, shape index: {}]
  %s7 = inlined_call_operand.vmem [shape: f32[32,32], index: 7, kind: input, shape index: {}]
  %s8 = inlined_call_operand.vmem [shape: f32[1,32], index: 8, kind: input, shape index: {}]
  %s9 = inlined_call_operand.vmem [shape: f32[512,32], index: 9, kind: output, shape index: {}]
  %s10 = sld [smem:[#allocation0]]
  $region69: #{tpu_custom_call.1} parent=0
    _
  %s12 = ssub.s32 1, %s10
  %s13 = scalar_select 0, %s12, %s10
  loop: start=0, step=1, limit=6
  $region2: #{tpu_custom_call.1} parent=0 // loop_pre_header
    _
  $region3: #{tpu_custom_call.1} parent=0 // loop_header
    %s15 = sphi 0, %s19
    %p16 = scmp.ge.s32.totalorder %s15, 6
    %s25 = sphi 0, %s27
    %s28 = sphi 0, %s25
    %s29 = sphi 0, %s28
    %s45 = sphi 0, %s29
    %s51 = sphi 0, %s53
    %s54 = sphi 0, %s51
    %s55 = sphi 0, %s54
    %s71 = sphi 0, %s55
    %s75 = sphi 0, %s75
    %s77 = sphi 0, %s75
    %s78 = sphi 0, %s77
    %s92 = sphi 0, %s78
    %s96 = sphi 0, %s96
    %s98 = sphi 0, %s96
    %s99 = sphi 0, %s98
    %s113 = sphi 0, %s99
    %s117 = sphi 0, %s117
    %s119 = sphi 0, %s117
    %s120 = sphi 0, %s119
    %s134 = sphi 0, %s120
    %s138 = sphi 0, %s138
    %s140 = sphi 0, %s138
    %s141 = sphi 0, %s140
    %s155 = sphi 0, %s141
    %s159 = sphi 0, %s159
    %s161 = sphi 0, %s159
    %s162 = sphi 0, %s161
    %s176 = sphi 0, %s162
    %s180 = sphi 0, %s180
    %s182 = sphi 0, %s180
    %s183 = sphi 0, %s182
    %s197 = sphi 0, %s183
    %s201 = sphi 0, %s201
    %s203 = sphi 0, %s201
    %s204 = sphi 0, %s203
    %s218 = sphi 0, %s204
    %s224 = sphi 0, %s226
    %s227 = sphi 0, %s224
    %s228 = sphi 0, %s227
    %s244 = sphi 0, %s228
  $region4: #{tpu_custom_call.1} parent=0 // loop_header_branch
    %18 = sbr.rel (%p16) target = $region8
  $region5: #{tpu_custom_call.1} parent=0 // loop_body
    %s20 = ssub.s32 %s15, 1
    %s21 = ssub.s32 %s15, 2
    %s22 = sadd.s32 %s15, 1
    %s23 = ssub.s32 %s15, %s22
    %p24 = scmp.eq.s32.totalorder %s23, 0
    %s26 = sadd.s32 %s25, 1
    %s27 = scalar_select %p24, %s25, %s26
    %p30 = pneg %p24
    %p31 = scmp.eq.s32.totalorder %s15, 3
    %p32 = por %p30, %p31
    %p33 = scmp.ne.s32.totalorder %s25, %s28
    %p34 = scmp.eq.s32.totalorder %s15, 0
    %p35 = por %p33, %p34
    %p36 = scmp.ne.s32.totalorder %s25, %s28
    %p37 = scmp.eq.s32.totalorder %s20, 3
    %p38 = por %p36, %p37
    %p39 = scmp.ne.s32.totalorder %s28, %s29
    %p40 = scmp.eq.s32.totalorder %s20, 0
    %p41 = por %p39, %p40
    %p42 = scmp.ne.s32.totalorder %s28, %s29
    %p43 = scmp.eq.s32.totalorder %s21, 3
    %p44 = por %p42, %p43
    %p46 = scmp.ne.s32.totalorder %s29, %s45
    %p47 = scmp.eq.s32.totalorder %s21, 0
    %p48 = por %p46, %p47
    %s49 = ssub.s32 %s15, %s22
    %p50 = scmp.eq.s32.totalorder %s49, 0
    %s52 = sadd.s32 %s51, 1
    %s53 = scalar_select %p50, %s51, %s52
    %p56 = pneg %p50
    %p57 = scmp.eq.s32.totalorder %s15, 3
    %p58 = por %p56, %p57
    %p59 = scmp.ne.s32.totalorder %s51, %s54
    %p60 = scmp.eq.s32.totalorder %s15, 0
    %p61 = por %p59, %p60
    %p62 = scmp.ne.s32.totalorder %s51, %s54
    %p63 = scmp.eq.s32.totalorder %s20, 3
    %p64 = por %p62, %p63
    %p65 = scmp.ne.s32.totalorder %s54, %s55
    %p66 = scmp.eq.s32.totalorder %s20, 0
    %p67 = por %p65, %p66
    %p68 = scmp.ne.s32.totalorder %s54, %s55
    %p69 = scmp.eq.s32.totalorder %s21, 3
    %p70 = por %p68, %p69
    %p72 = scmp.ne.s32.totalorder %s55, %s71
    %p73 = scmp.eq.s32.totalorder %s21, 0
    %p74 = por %p72, %p73
    %s76 = sadd.s32 %s75, 1
    %p79 = scmp.eq.s32.totalorder %s15, 3
    %p80 = scmp.ne.s32.totalorder %s75, %s77
    %p81 = scmp.eq.s32.totalorder %s15, 0
    %p82 = por %p80, %p81
    %p83 = scmp.ne.s32.totalorder %s75, %s77
    %p84 = scmp.eq.s32.totalorder %s20, 3
    %p85 = por %p83, %p84
    %p86 = scmp.ne.s32.totalorder %s77, %s78
    %p87 = scmp.eq.s32.totalorder %s20, 0
    %p88 = por %p86, %p87
    %p89 = scmp.ne.s32.totalorder %s77, %s78
    %p90 = scmp.eq.s32.totalorder %s21, 3
    %p91 = por %p89, %p90
    %p93 = scmp.ne.s32.totalorder %s78, %s92
    %p94 = scmp.eq.s32.totalorder %s21, 0
    %p95 = por %p93, %p94
    %s97 = sadd.s32 %s96, 1
    %p100 = scmp.eq.s32.totalorder %s15, 3
    %p101 = scmp.ne.s32.totalorder %s96, %s98
    %p102 = scmp.eq.s32.totalorder %s15, 0
    %p103 = por %p101, %p102
    %p104 = scmp.ne.s32.totalorder %s96, %s98
    %p105 = scmp.eq.s32.totalorder %s20, 3
    %p106 = por %p104, %p105
    %p107 = scmp.ne.s32.totalorder %s98, %s99
    %p108 = scmp.eq.s32.totalorder %s20, 0
    %p109 = por %p107, %p108
    %p110 = scmp.ne.s32.totalorder %s98, %s99
    %p111 = scmp.eq.s32.totalorder %s21, 3
    %p112 = por %p110, %p111
    %p114 = scmp.ne.s32.totalorder %s99, %s113
    %p115 = scmp.eq.s32.totalorder %s21, 0
    %p116 = por %p114, %p115
    %s118 = sadd.s32 %s117, 1
    %p121 = scmp.eq.s32.totalorder %s15, 3
    %p122 = scmp.ne.s32.totalorder %s117, %s119
    %p123 = scmp.eq.s32.totalorder %s15, 0
    %p124 = por %p122, %p123
    %p125 = scmp.ne.s32.totalorder %s117, %s119
    %p126 = scmp.eq.s32.totalorder %s20, 3
    %p127 = por %p125, %p126
    %p128 = scmp.ne.s32.totalorder %s119, %s120
    %p129 = scmp.eq.s32.totalorder %s20, 0
    %p130 = por %p128, %p129
    %p131 = scmp.ne.s32.totalorder %s119, %s120
    %p132 = scmp.eq.s32.totalorder %s21, 3
    %p133 = por %p131, %p132
    %p135 = scmp.ne.s32.totalorder %s120, %s134
    %p136 = scmp.eq.s32.totalorder %s21, 0
    %p137 = por %p135, %p136
    %s139 = sadd.s32 %s138, 1
    %p142 = scmp.eq.s32.totalorder %s15, 3
    %p143 = scmp.ne.s32.totalorder %s138, %s140
    %p144 = scmp.eq.s32.totalorder %s15, 0
    %p145 = por %p143, %p144
    %p146 = scmp.ne.s32.totalorder %s138, %s140
    %p147 = scmp.eq.s32.totalorder %s20, 3
    %p148 = por %p146, %p147
    %p149 = scmp.ne.s32.totalorder %s140, %s141
    %p150 = scmp.eq.s32.totalorder %s20, 0
    %p151 = por %p149, %p150
    %p152 = scmp.ne.s32.totalorder %s140, %s141
    %p153 = scmp.eq.s32.totalorder %s21, 3
    %p154 = por %p152, %p153
    %p156 = scmp.ne.s32.totalorder %s141, %s155
    %p157 = scmp.eq.s32.totalorder %s21, 0
    %p158 = por %p156, %p157
    %s160 = sadd.s32 %s159, 1
    %p163 = scmp.eq.s32.totalorder %s15, 3
    %p164 = scmp.ne.s32.totalorder %s159, %s161
    %p165 = scmp.eq.s32.totalorder %s15, 0
    %p166 = por %p164, %p165
    %p167 = scmp.ne.s32.totalorder %s159, %s161
    %p168 = scmp.eq.s32.totalorder %s20, 3
    %p169 = por %p167, %p168
    %p170 = scmp.ne.s32.totalorder %s161, %s162
    %p171 = scmp.eq.s32.totalorder %s20, 0
    %p172 = por %p170, %p171
    %p173 = scmp.ne.s32.totalorder %s161, %s162
    %p174 = scmp.eq.s32.totalorder %s21, 3
    %p175 = por %p173, %p174
    %p177 = scmp.ne.s32.totalorder %s162, %s176
    %p178 = scmp.eq.s32.totalorder %s21, 0
    %p179 = por %p177, %p178
    %s181 = sadd.s32 %s180, 1
    %p184 = scmp.eq.s32.totalorder %s15, 3
    %p185 = scmp.ne.s32.totalorder %s180, %s182
    %p186 = scmp.eq.s32.totalorder %s15, 0
    %p187 = por %p185, %p186
    %p188 = scmp.ne.s32.totalorder %s180, %s182
    %p189 = scmp.eq.s32.totalorder %s20, 3
    %p190 = por %p188, %p189
    %p191 = scmp.ne.s32.totalorder %s182, %s183
    %p192 = scmp.eq.s32.totalorder %s20, 0
    %p193 = por %p191, %p192
    %p194 = scmp.ne.s32.totalorder %s182, %s183
    %p195 = scmp.eq.s32.totalorder %s21, 3
    %p196 = por %p194, %p195
    %p198 = scmp.ne.s32.totalorder %s183, %s197
    %p199 = scmp.eq.s32.totalorder %s21, 0
    %p200 = por %p198, %p199
    %s202 = sadd.s32 %s201, 1
    %p205 = scmp.eq.s32.totalorder %s15, 3
    %p206 = scmp.ne.s32.totalorder %s201, %s203
    %p207 = scmp.eq.s32.totalorder %s15, 0
    %p208 = por %p206, %p207
    %p209 = scmp.ne.s32.totalorder %s201, %s203
    %p210 = scmp.eq.s32.totalorder %s20, 3
    %p211 = por %p209, %p210
    %p212 = scmp.ne.s32.totalorder %s203, %s204
    %p213 = scmp.eq.s32.totalorder %s20, 0
    %p214 = por %p212, %p213
    %p215 = scmp.ne.s32.totalorder %s203, %s204
    %p216 = scmp.eq.s32.totalorder %s21, 3
    %p217 = por %p215, %p216
    %p219 = scmp.ne.s32.totalorder %s204, %s218
    %p220 = scmp.eq.s32.totalorder %s21, 0
    %p221 = por %p219, %p220
    %s222 = ssub.s32 %s15, %s22
    %p223 = scmp.eq.s32.totalorder %s222, 0
    %s225 = sadd.s32 %s224, 1
    %s226 = scalar_select %p223, %s224, %s225
    %p229 = pneg %p223
    %p230 = scmp.eq.s32.totalorder %s15, 3
    %p231 = por %p229, %p230
    %p232 = scmp.ne.s32.totalorder %s224, %s227
    %p233 = scmp.eq.s32.totalorder %s15, 0
    %p234 = por %p232, %p233
    %p235 = scmp.ne.s32.totalorder %s224, %s227
    %p236 = scmp.eq.s32.totalorder %s20, 3
    %p237 = por %p235, %p236
    %p238 = scmp.ne.s32.totalorder %s227, %s228
    %p239 = scmp.eq.s32.totalorder %s20, 0
    %p240 = por %p238, %p239
    %p241 = scmp.ne.s32.totalorder %s227, %s228
    %p242 = scmp.eq.s32.totalorder %s21, 3
    %p243 = por %p241, %p242
    %p245 = scmp.ne.s32.totalorder %s228, %s244
    %p246 = scmp.eq.s32.totalorder %s21, 0
    %p247 = por %p245, %p246
    %p248 = scmp.le.s32.totalorder 1, %s15
    %p249 = scmp.lt.s32.totalorder %s15, 5
    %p250 = pnand %p248, %p249
    %p251 = pneg %p250
    // Predicated region
    $region9: #{tpu_custom_call.1} parent=5 // pred_check
      _
    $region10: #{tpu_custom_call.1} parent=5 // pred_check_branch
      %253 = sbr.rel (%p250) target = $region12
    $region11: #{tpu_custom_call.1} parent=5 // pred_region
      %s254 = ssub.s32 %s15, 1
      // Predicated region
      $region13: #{tpu_custom_call.1} parent=11 // pred_check
        %p255 = pneg %p88
      $region14: #{tpu_custom_call.1} parent=11 // pred_check_branch
        %257 = sbr.rel (%p255) target = $region16
      $region15: #{tpu_custom_call.1} parent=11 // pred_region
        _
      $region16: #{tpu_custom_call.1} parent=11 // pred_fallthru
        _
      // Predicated region
      $region17: #{tpu_custom_call.1} parent=11 // pred_check
        %p258 = pneg %p109
      $region18: #{tpu_custom_call.1} parent=11 // pred_check_branch
        %260 = sbr.rel (%p258) target = $region20
      $region19: #{tpu_custom_call.1} parent=11 // pred_region
        _
      $region20: #{tpu_custom_call.1} parent=11 // pred_fallthru
        _
      // Predicated region
      $region21: #{tpu_custom_call.1} parent=11 // pred_check
        %p261 = pneg %p130
      $region22: #{tpu_custom_call.1} parent=11 // pred_check_branch
        %263 = sbr.rel (%p261) target = $region24
      $region23: #{tpu_custom_call.1} parent=11 // pred_region
        _
      $region24: #{tpu_custom_call.1} parent=11 // pred_fallthru
        _
      // Predicated region
      $region25: #{tpu_custom_call.1} parent=11 // pred_check
        %p264 = pneg %p151
      $region26: #{tpu_custom_call.1} parent=11 // pred_check_branch
        %266 = sbr.rel (%p264) target = $region28
      $region27: #{tpu_custom_call.1} parent=11 // pred_region
        _
      $region28: #{tpu_custom_call.1} parent=11 // pred_fallthru
        _
      // Predicated region
      $region29: #{tpu_custom_call.1} parent=11 // pred_check
        %p267 = pneg %p172
      $region30: #{tpu_custom_call.1} parent=11 // pred_check_branch
        %269 = sbr.rel (%p267) target = $region32
      $region31: #{tpu_custom_call.1} parent=11 // pred_region
        _
      $region32: #{tpu_custom_call.1} parent=11 // pred_fallthru
        _
      // Predicated region
      $region33: #{tpu_custom_call.1} parent=11 // pred_check
        %p270 = pneg %p193
      $region34: #{tpu_custom_call.1} parent=11 // pred_check_branch
        %272 = sbr.rel (%p270) target = $region36
      $region35: #{tpu_custom_call.1} parent=11 // pred_region
        _
      $region36: #{tpu_custom_call.1} parent=11 // pred_fallthru
        _
      // Predicated region
      $region37: #{tpu_custom_call.1} parent=11 // pred_check
        %p273 = pneg %p214
      $region38: #{tpu_custom_call.1} parent=11 // pred_check_branch
        %275 = sbr.rel (%p273) target = $region40
      $region39: #{tpu_custom_call.1} parent=11 // pred_region
        _
      $region40: #{tpu_custom_call.1} parent=11 // pred_fallthru
        _
    $region12: #{tpu_custom_call.1} parent=5 // pred_fallthru
      _
    %p276 = scmp.lt.s32.totalorder %s15, 4
    // Predicated region
    $region41: #{tpu_custom_call.1} parent=5 // pred_check
      %p277 = pneg %p276
    $region42: #{tpu_custom_call.1} parent=5 // pred_check_branch
      %279 = sbr.rel (%p277) target = $region44
    $region43: #{tpu_custom_call.1} parent=5 // pred_region
      // Predicated region
      $region45: #{tpu_custom_call.1} parent=43 // pred_check
        %p280 = pneg %p35
      $region46: #{tpu_custom_call.1} parent=43 // pred_check_branch
        %282 = sbr.rel (%p280) target = $region48
      $region47: #{tpu_custom_call.1} parent=43 // pred_region
        %s283 = smul.u32 16, %s15
        %p284 = scmp.lt.s32.totalorder %s283, 63
        %s285 = scalar_select %p284, %s283, 63
        %s286 = smul.addr %s285, 8
        %s287 = scalar_lea.vmem %s0, %s286
        %s288 = smul.u32 16, %s15
      $region48: #{tpu_custom_call.1} parent=43 // pred_fallthru
        _
      // Predicated region
      $region49: #{tpu_custom_call.1} parent=43 // pred_check
        %p289 = pneg %p61
      $region50: #{tpu_custom_call.1} parent=43 // pred_check_branch
        %291 = sbr.rel (%p289) target = $region52
      $region51: #{tpu_custom_call.1} parent=43 // pred_region
        %s292 = smul.u32 16, %s15
        %p293 = scmp.lt.s32.totalorder %s292, 63
        %s294 = scalar_select %p293, %s292, 63
        %s295 = smul.addr %s294, 8
        %s296 = scalar_lea.vmem %s1, %s295
        %s297 = smul.u32 16, %s15
      $region52: #{tpu_custom_call.1} parent=43 // pred_fallthru
        _
    $region44: #{tpu_custom_call.1} parent=5 // pred_fallthru
      _
    %p298 = scmp.le.s32.totalorder 1, %s15
    %p299 = scmp.lt.s32.totalorder %s15, 5
    %p300 = pnand %p298, %p299
    %p301 = pneg %p300
    // Predicated region
    $region53: #{tpu_custom_call.1} parent=5 // pred_check
      _
    $region54: #{tpu_custom_call.1} parent=5 // pred_check_branch
      %303 = sbr.rel (%p300) target = $region56
    $region55: #{tpu_custom_call.1} parent=5 // pred_region
      %s304 = ssub.s32 %s15, 1
      %s305 = smul.u32 16, %s20
      %p306 = scmp.lt.s32.totalorder %s305, 63
      %s307 = scalar_select %p306, %s305, 63
      %s308 = smul.addr %s307, 8
      %s309 = scalar_lea.vmem %s0, %s308
      %p310 = pneg %p41
      %p311 = pneg %p38
      %s312 = smul.u32 16, %s20
      %p313 = scmp.lt.s32.totalorder %s312, 63
      %s314 = scalar_select %p313, %s312, 63
      %s315 = smul.addr %s314, 8
      %s316 = scalar_lea.vmem %s1, %s315
      %p317 = pneg %p67
      %p318 = pneg %p64
      %p319 = pneg %p88
      %p320 = pneg %p85
      %p321 = pneg %p109
      %p322 = pneg %p106
      %p323 = pneg %p130
      %p324 = pneg %p127
      %p325 = pneg %p151
      %p326 = pneg %p148
      %p327 = pneg %p172
      %p328 = pneg %p169
      %p329 = pneg %p193
      %p330 = pneg %p190
      %p331 = pneg %p214
      %p332 = pneg %p211
      %p333 = pneg %p240
      %p334 = pneg %p237
      %s335 = smul.u32 16, %s20
      %p336 = scmp.lt.s32.totalorder %s335, 63
      %s337 = scalar_select %p336, %s335, 63
      %s338 = smul.addr %s337, 8
      %s339 = scalar_lea.vmem %s9, %s338
      %s340 = smul.u32 16, %s20
      %p341 = scmp.lt.s32.totalorder %s340, 63
      %s342 = scalar_select %p341, %s340, 63
      %s343 = smul.addr %s342, 8
      %s344 = scalar_lea.vmem %s0, %s343
      %s345 = smul.u32 16, %s20
      %s346 = smul.u32 16, %s20
      %p347 = scmp.lt.s32.totalorder %s346, 63
      %s348 = scalar_select %p347, %s346, 63
      %s349 = smul.addr %s348, 8
      %s350 = scalar_lea.vmem %s1, %s349
      %s351 = smul.u32 16, %s20
      %s352 = smul.u32 16, %s20
      %p353 = scmp.lt.s32.totalorder %s352, 63
      %s354 = scalar_select %p353, %s352, 63
      %s355 = smul.addr %s354, 8
      %s356 = scalar_lea.vmem %s9, %s355
      %s357 = smul.u32 16, %s20
      %v358 = vld [vmem:[%s344] sm:$0xff]
      %v359 = vld [vmem:[%s344 + $0x8] sm:$0xff]
      %v360 = vld [vmem:[%s344 + $0x10] sm:$0xff]
      %v361 = vld [vmem:[%s344 + $0x18] sm:$0xff]
      %v362 = vld [vmem:[%s344 + $0x20] sm:$0xff]
      %v363 = vld [vmem:[%s344 + $0x28] sm:$0xff]
      %v364 = vld [vmem:[%s344 + $0x30] sm:$0xff]
      %v365 = vld [vmem:[%s344 + $0x38] sm:$0xff]
      %v366 = vld [vmem:[%s344 + $0x40] sm:$0xff]
      %v367 = vld [vmem:[%s344 + $0x48] sm:$0xff]
      %v368 = vld [vmem:[%s344 + $0x50] sm:$0xff]
      %v369 = vld [vmem:[%s344 + $0x58] sm:$0xff]
      %v370 = vld [vmem:[%s344 + $0x60] sm:$0xff]
      %v371 = vld [vmem:[%s344 + $0x68] sm:$0xff]
      %v372 = vld [vmem:[%s344 + $0x70] sm:$0xff]
      %v373 = vld [vmem:[%s344 + $0x78] sm:$0xff]
      %v374 = vld [vmem:[%s350] sm:$0xff]
      %v375 = vld [vmem:[%s350 + $0x8] sm:$0xff]
      %v376 = vld [vmem:[%s350 + $0x10] sm:$0xff]
      %v377 = vld [vmem:[%s350 + $0x18] sm:$0xff]
      %v378 = vld [vmem:[%s350 + $0x20] sm:$0xff]
      %v379 = vld [vmem:[%s350 + $0x28] sm:$0xff]
      %v380 = vld [vmem:[%s350 + $0x30] sm:$0xff]
      %v381 = vld [vmem:[%s350 + $0x38] sm:$0xff]
      %v382 = vld [vmem:[%s350 + $0x40] sm:$0xff]
      %v383 = vld [vmem:[%s350 + $0x48] sm:$0xff]
      %v384 = vld [vmem:[%s350 + $0x50] sm:$0xff]
      %v385 = vld [vmem:[%s350 + $0x58] sm:$0xff]
      %v386 = vld [vmem:[%s350 + $0x60] sm:$0xff]
      %v387 = vld [vmem:[%s350 + $0x68] sm:$0xff]
      %v388 = vld [vmem:[%s350 + $0x70] sm:$0xff]
      %v389 = vld [vmem:[%s350 + $0x78] sm:$0xff]
      %406 = vrot.lane.b32.xlu0 %v374, 32
      %v407 = vpop.permute.xlu0 %406
      %408 = vrot.lane.b32.xlu0 %v375, 32
      %v409 = vpop.permute.xlu0 %408
      %410 = vrot.lane.b32.xlu0 %v376, 32
      %v411 = vpop.permute.xlu0 %410
      %412 = vrot.lane.b32.xlu0 %v377, 32
      %v413 = vpop.permute.xlu0 %412
      %414 = vrot.lane.b32.xlu0 %v378, 32
      %v415 = vpop.permute.xlu0 %414
      %416 = vrot.lane.b32.xlu0 %v379, 32
      %v417 = vpop.permute.xlu0 %416
      %418 = vrot.lane.b32.xlu0 %v380, 32
      %v419 = vpop.permute.xlu0 %418
      %420 = vrot.lane.b32.xlu0 %v381, 32
      %v421 = vpop.permute.xlu0 %420
      %422 = vrot.lane.b32.xlu0 %v382, 32
      %v423 = vpop.permute.xlu0 %422
      %424 = vrot.lane.b32.xlu0 %v383, 32
      %v425 = vpop.permute.xlu0 %424
      %426 = vrot.lane.b32.xlu0 %v384, 32
      %v427 = vpop.permute.xlu0 %426
      %428 = vrot.lane.b32.xlu0 %v385, 32
      %v429 = vpop.permute.xlu0 %428
      %430 = vrot.lane.b32.xlu0 %v386, 32
      %v431 = vpop.permute.xlu0 %430
      %432 = vrot.lane.b32.xlu0 %v387, 32
      %v433 = vpop.permute.xlu0 %432
      %434 = vrot.lane.b32.xlu0 %v388, 32
      %v435 = vpop.permute.xlu0 %434
      %436 = vrot.lane.b32.xlu0 %v389, 32
      %v437 = vpop.permute.xlu0 %436
      %vm454 = vcmask 261120
      %v455 = vsel %vm454, %v358, %v407
      %v456 = vsel %vm454, %v359, %v409
      %v457 = vsel %vm454, %v360, %v411
      %v458 = vsel %vm454, %v361, %v413
      %v459 = vsel %vm454, %v362, %v415
      %v460 = vsel %vm454, %v363, %v417
      %v461 = vsel %vm454, %v364, %v419
      %v462 = vsel %vm454, %v365, %v421
      %v463 = vsel %vm454, %v366, %v423
      %v464 = vsel %vm454, %v367, %v425
      %v465 = vsel %vm454, %v368, %v427
      %v466 = vsel %vm454, %v369, %v429
      %v467 = vsel %vm454, %v370, %v431
      %v468 = vsel %vm454, %v371, %v433
      %v469 = vsel %vm454, %v372, %v435
      %v470 = vsel %vm454, %v373, %v437
      %v471 = vld [vmem:[%s3] sm:$0xff]
      %v472 = vld [vmem:[%s3 + $0x8] sm:$0xff]
      %v473 = vld [vmem:[%s3 + $0x10] sm:$0xff]
      %v474 = vld [vmem:[%s3 + $0x18] sm:$0xff]
      %v475 = vld [vmem:[%s3 + $0x20] sm:$0xff]
      %v476 = vld [vmem:[%s3 + $0x28] sm:$0xff]
      %v477 = vld [vmem:[%s3 + $0x30] sm:$0xff]
      %v478 = vld [vmem:[%s3 + $0x38] sm:$0xff]
      %v479 = vld [vmem:[%s4] sm:$0x1]
      %v481 = vlaneseq
      %v482 = vshrl.u32 %v481, 7
      %v483 = vsub.s32 0, %v482
      %v484 = vrot.slane %v479, %v483
      %vm486 = vcmask 523264
      %v488 = vsel %vm486, %v455, 0
      %v491 = vsel %vm486, %v456, 0
      %v494 = vsel %vm486, %v457, 0
      %v497 = vsel %vm486, %v458, 0
      %v500 = vsel %vm486, %v459, 0
      %v503 = vsel %vm486, %v460, 0
      %v506 = vsel %vm486, %v461, 0
      %v509 = vsel %vm486, %v462, 0
      %v512 = vsel %vm486, %v463, 0
      %v515 = vsel %vm486, %v464, 0
      %v518 = vsel %vm486, %v465, 0
      %v521 = vsel %vm486, %v466, 0
      %v524 = vsel %vm486, %v467, 0
      %v527 = vsel %vm486, %v468, 0
      %v530 = vsel %vm486, %v469, 0
      %v533 = vsel %vm486, %v470, 0
      %535 = vmatprep.subr.mxu0 0.0
      %536 = vmatpush1.msra.mxu0 %v471
      %537 = vmatprep.subr.mxu0 0.0
      %538 = vmatpush1.msra.mxu0 %v472
      %539 = vmatprep.subr.mxu0 0.0
      %540 = vmatpush1.msra.mxu0 %v473
      %541 = vmatprep.subr.mxu0 0.0
      %542 = vmatpush1.msra.mxu0 %v474
      %543 = vmatprep.subr.mxu0 0.0
      %544 = vmatpush1.msra.mxu0 %v475
      %545 = vmatprep.subr.mxu0 0.0
      %546 = vmatpush1.msra.mxu0 %v476
      %547 = vmatprep.subr.mxu0 0.0
      %548 = vmatpush1.msra.mxu0 %v477
      %549 = vmatprep.subr.mxu0 0.0
      %550 = vmatpush1.msra.mxu0 %v478
      %551 = vmatprep.subr.mxu0 0.0
      %552 = vmatpush1.msra.mxu0 0.0
      %553 = vmatprep.subr.mxu0 0.0
      %554 = vmatpush1.msra.mxu0 0.0
      %555 = vmatprep.subr.mxu0 0.0
      %556 = vmatpush1.msra.mxu0 0.0
      %557 = vmatprep.subr.mxu0 0.0
      %558 = vmatpush1.msra.mxu0 0.0
      %559 = vmatprep.subr.mxu0 0.0
      %560 = vmatpush1.msra.mxu0 0.0
      %561 = vmatprep.subr.mxu0 0.0
      %562 = vmatpush1.msra.mxu0 0.0
      %563 = vmatprep.subr.mxu0 0.0
      %564 = vmatpush1.msra.mxu0 0.0
      %565 = vmatprep.subr.mxu0 0.0
      %566 = vmatpush1.msra.mxu0 0.0
      %567 = vmatprep.subr.mxu0 0.0
      %568 = vmatpush1.msra.mxu0 0.0
      %569 = vmatprep.subr.mxu0 0.0
      %570 = vmatpush1.msra.mxu0 0.0
      %571 = vmatprep.subr.mxu0 0.0
      %572 = vmatpush1.msra.mxu0 0.0
      %573 = vmatprep.subr.mxu0 0.0
      %574 = vmatpush1.msra.mxu0 0.0
      %575 = vmatprep.subr.mxu0 0.0
      %576 = vmatpush1.msra.mxu0 0.0
      %577 = vmatprep.subr.mxu0 0.0
      %578 = vmatpush1.msra.mxu0 0.0
      %579 = vmatprep.subr.mxu0 0.0
      %580 = vmatpush1.msra.mxu0 0.0
      %581 = vmatprep.subr.mxu0 0.0
      %582 = vmatpush1.msra.mxu0 0.0
      %583 = vmatprep.subr.mxu0 0.0
      %584 = vmatpush1.msra.mxu0 0.0
      %585 = vmatprep.subr.mxu0 0.0
      %586 = vmatpush1.msra.mxu0 0.0
      %587 = vmatprep.subr.mxu0 0.0
      %588 = vmatpush1.msra.mxu0 0.0
      %589 = vmatprep.subr.mxu0 0.0
      %590 = vmatpush1.msra.mxu0 0.0
      %591 = vmatprep.subr.mxu0 0.0
      %592 = vmatpush1.msra.mxu0 0.0
      %593 = vmatprep.subr.mxu0 0.0
      %594 = vmatpush1.msra.mxu0 0.0
      %595 = vmatprep.subr.mxu0 0.0
      %596 = vmatpush1.msra.mxu0 0.0
      %597 = vmatprep.subr.mxu0 0.0
      %598 = vmatpush1.msra.mxu0 0.0
      %599 = vmatprep.mubr.f32.mxu0 0.0
      %600 = vmatmul.mubr.f32.gmra.mrb[0].mxu0 %v488
      %v601 = vpop.f32.mrb[0].mxu0
      %v602 = vadd.f32 %v484, %v601
      %v603 = vpop.f32.mrb[0].mxu0
      %604 = vmatprep.mubr.f32.mxu0 0.0
      %605 = vmatmul.mubr.f32.gmra.mrb[0].mxu0 %v491
      %v606 = vpop.f32.mrb[0].mxu0
      %v607 = vadd.f32 %v484, %v606
      %v608 = vpop.f32.mrb[0].mxu0
      %609 = vmatprep.mubr.f32.mxu0 0.0
      %610 = vmatmul.mubr.f32.gmra.mrb[0].mxu0 %v494
      %v611 = vpop.f32.mrb[0].mxu0
      %v612 = vadd.f32 %v484, %v611
      %v613 = vpop.f32.mrb[0].mxu0
      %614 = vmatprep.mubr.f32.mxu0 0.0
      %615 = vmatmul.mubr.f32.gmra.mrb[0].mxu0 %v497
      %v616 = vpop.f32.mrb[0].mxu0
      %v617 = vadd.f32 %v484, %v616
      %v618 = vpop.f32.mrb[0].mxu0
      %619 = vmatprep.mubr.f32.mxu0 0.0
      %620 = vmatmul.mubr.f32.gmra.mrb[0].mxu0 %v500
      %v621 = vpop.f32.mrb[0].mxu0
      %v622 = vadd.f32 %v484, %v621
      %v623 = vpop.f32.mrb[0].mxu0
      %624 = vmatprep.mubr.f32.mxu0 0.0
      %625 = vmatmul.mubr.f32.gmra.mrb[0].mxu0 %v503
      %v626 = vpop.f32.mrb[0].mxu0
      %v627 = vadd.f32 %v484, %v626
      %v628 = vpop.f32.mrb[0].mxu0
      %629 = vmatprep.mubr.f32.mxu0 0.0
      %630 = vmatmul.mubr.f32.gmra.mrb[0].mxu0 %v506
      %v631 = vpop.f32.mrb[0].mxu0
      %v632 = vadd.f32 %v484, %v631
      %v633 = vpop.f32.mrb[0].mxu0
      %634 = vmatprep.mubr.f32.mxu0 0.0
      %635 = vmatmul.mubr.f32.gmra.mrb[0].mxu0 %v509
      %v636 = vpop.f32.mrb[0].mxu0
      %v637 = vadd.f32 %v484, %v636
      %v638 = vpop.f32.mrb[0].mxu0
      %639 = vmatprep.mubr.f32.mxu0 0.0
      %640 = vmatmul.mubr.f32.gmra.mrb[0].mxu0 %v512
      %v641 = vpop.f32.mrb[0].mxu0
      %v642 = vadd.f32 %v484, %v641
      %v643 = vpop.f32.mrb[0].mxu0
      %644 = vmatprep.mubr.f32.mxu0 0.0
      %645 = vmatmul.mubr.f32.gmra.mrb[0].mxu0 %v515
      %v646 = vpop.f32.mrb[0].mxu0
      %v647 = vadd.f32 %v484, %v646
      %v648 = vpop.f32.mrb[0].mxu0
      %649 = vmatprep.mubr.f32.mxu0 0.0
      %650 = vmatmul.mubr.f32.gmra.mrb[0].mxu0 %v518
      %v651 = vpop.f32.mrb[0].mxu0
      %v652 = vadd.f32 %v484, %v651
      %v653 = vpop.f32.mrb[0].mxu0
      %654 = vmatprep.mubr.f32.mxu0 0.0
      %655 = vmatmul.mubr.f32.gmra.mrb[0].mxu0 %v521
      %v656 = vpop.f32.mrb[0].mxu0
      %v657 = vadd.f32 %v484, %v656
      %v658 = vpop.f32.mrb[0].mxu0
      %659 = vmatprep.mubr.f32.mxu0 0.0
      %660 = vmatmul.mubr.f32.gmra.mrb[0].mxu0 %v524
      %v661 = vpop.f32.mrb[0].mxu0
      %v662 = vadd.f32 %v484, %v661
      %v663 = vpop.f32.mrb[0].mxu0
      %664 = vmatprep.mubr.f32.mxu0 0.0
      %665 = vmatmul.mubr.f32.gmra.mrb[0].mxu0 %v527
      %v666 = vpop.f32.mrb[0].mxu0
      %v667 = vadd.f32 %v484, %v666
      %v668 = vpop.f32.mrb[0].mxu0
      %669 = vmatprep.mubr.f32.mxu0 0.0
      %670 = vmatmul.mubr.f32.gmra.mrb[0].mxu0 %v530
      %v671 = vpop.f32.mrb[0].mxu0
      %v672 = vadd.f32 %v484, %v671
      %v673 = vpop.f32.mrb[0].mxu0
      %674 = vmatprep.mubr.f32.mxu0 0.0
      %675 = vmatmul.mubr.f32.gmra.mrb[0].mxu0 %v533
      %v676 = vpop.f32.mrb[0].mxu0
      %v677 = vadd.f32 %v484, %v676
      %v678 = vpop.f32.mrb[0].mxu0
      %679 = vdwg.mxu0
      %v680 = vmax.f32 %v602, 0.0
      %v681 = vmax.f32 %v607, 0.0
      %v682 = vmax.f32 %v612, 0.0
      %v683 = vmax.f32 %v617, 0.0
      %v684 = vmax.f32 %v622, 0.0
      %v685 = vmax.f32 %v627, 0.0
      %v686 = vmax.f32 %v632, 0.0
      %v687 = vmax.f32 %v637, 0.0
      %v688 = vmax.f32 %v642, 0.0
      %v689 = vmax.f32 %v647, 0.0
      %v690 = vmax.f32 %v652, 0.0
      %v691 = vmax.f32 %v657, 0.0
      %v692 = vmax.f32 %v662, 0.0
      %v693 = vmax.f32 %v667, 0.0
      %v694 = vmax.f32 %v672, 0.0
      %v695 = vmax.f32 %v677, 0.0
      %v696 = vld [vmem:[%s2] sm:$0xff]
      %v697 = vld [vmem:[%s2 + $0x8] sm:$0xff]
      %v698 = vld [vmem:[%s2 + $0x10] sm:$0xff]
      %v699 = vld [vmem:[%s2 + $0x18] sm:$0xff]
      %v700 = vld [vmem:[%s2 + $0x20] sm:$0xff]
      %v701 = vld [vmem:[%s2 + $0x28] sm:$0xff]
      %v702 = vld [vmem:[%s2 + $0x30] sm:$0xff]
      %v703 = vld [vmem:[%s2 + $0x38] sm:$0xff]
      %v704 = vld [vmem:[%s2 + $0x40] sm:$0xff]
      %v705 = vld [vmem:[%s2 + $0x48] sm:$0xff]
      %v706 = vld [vmem:[%s2 + $0x50] sm:$0xff]
      %v707 = vld [vmem:[%s2 + $0x58] sm:$0xff]
      %v708 = vld [vmem:[%s2 + $0x60] sm:$0xff]
      %v709 = vld [vmem:[%s2 + $0x68] sm:$0xff]
      %v710 = vld [vmem:[%s2 + $0x70] sm:$0xff]
      %v711 = vld [vmem:[%s2 + $0x78] sm:$0xff]
      %728 = vrot.lane.b32.xlu0 %v680, 96
      %v729 = vpop.permute.xlu0 %728
      %730 = vrot.lane.b32.xlu0 %v681, 96
      %v731 = vpop.permute.xlu0 %730
      %732 = vrot.lane.b32.xlu0 %v682, 96
      %v733 = vpop.permute.xlu0 %732
      %734 = vrot.lane.b32.xlu0 %v683, 96
      %v735 = vpop.permute.xlu0 %734
      %736 = vrot.lane.b32.xlu0 %v684, 96
      %v737 = vpop.permute.xlu0 %736
      %738 = vrot.lane.b32.xlu0 %v685, 96
      %v739 = vpop.permute.xlu0 %738
      %740 = vrot.lane.b32.xlu0 %v686, 96
      %v741 = vpop.permute.xlu0 %740
      %742 = vrot.lane.b32.xlu0 %v687, 96
      %v743 = vpop.permute.xlu0 %742
      %744 = vrot.lane.b32.xlu0 %v688, 96
      %v745 = vpop.permute.xlu0 %744
      %746 = vrot.lane.b32.xlu0 %v689, 96
      %v747 = vpop.permute.xlu0 %746
      %748 = vrot.lane.b32.xlu0 %v690, 96
      %v749 = vpop.permute.xlu0 %748
      %750 = vrot.lane.b32.xlu0 %v691, 96
      %v751 = vpop.permute.xlu0 %750
      %752 = vrot.lane.b32.xlu0 %v692, 96
      %v753 = vpop.permute.xlu0 %752
      %754 = vrot.lane.b32.xlu0 %v693, 96
      %v755 = vpop.permute.xlu0 %754
      %756 = vrot.lane.b32.xlu0 %v694, 96
      %v757 = vpop.permute.xlu0 %756
      %758 = vrot.lane.b32.xlu0 %v695, 96
      %v759 = vpop.permute.xlu0 %758
      %vm760 = vcmask 130048
      %v761 = vsel %vm760, %v680, 0
      %v763 = vsel %vm760, %v681, 0
      %v765 = vsel %vm760, %v682, 0
      %v767 = vsel %vm760, %v683, 0
      %v769 = vsel %vm760, %v684, 0
      %v771 = vsel %vm760, %v685, 0
      %v773 = vsel %vm760, %v686, 0
      %v775 = vsel %vm760, %v687, 0
      %v777 = vsel %vm760, %v688, 0
      %v779 = vsel %vm760, %v689, 0
      %v781 = vsel %vm760, %v690, 0
      %v783 = vsel %vm760, %v691, 0
      %v785 = vsel %vm760, %v692, 0
      %v787 = vsel %vm760, %v693, 0
      %v789 = vsel %vm760, %v694, 0
      %v791 = vsel %vm760, %v695, 0
      %v793 = vsel %vm760, %v729, 0
      %v795 = vsel %vm760, %v731, 0
      %v797 = vsel %vm760, %v733, 0
      %v799 = vsel %vm760, %v735, 0
      %v801 = vsel %vm760, %v737, 0
      %v803 = vsel %vm760, %v739, 0
      %v805 = vsel %vm760, %v741, 0
      %v807 = vsel %vm760, %v743, 0
      %v809 = vsel %vm760, %v745, 0
      %v811 = vsel %vm760, %v747, 0
      %v813 = vsel %vm760, %v749, 0
      %v815 = vsel %vm760, %v751, 0
      %v817 = vsel %vm760, %v753, 0
      %v819 = vsel %vm760, %v755, 0
      %v821 = vsel %vm760, %v757, 0
      %v823 = vsel %vm760, %v759, 0
      %825 = vmatprep.subr.mxu0 0.0
      %826 = vmatpush1.xpose.msra.mxu0 %v793
      %827 = vmatprep.subr.mxu0 0.0
      %828 = vmatpush1.xpose.msra.mxu0 %v795
      %829 = vmatprep.subr.mxu0 0.0
      %830 = vmatpush1.xpose.msra.mxu0 %v797
      %831 = vmatprep.subr.mxu0 0.0
      %832 = vmatpush1.xpose.msra.mxu0 %v799
      %833 = vmatprep.subr.mxu0 0.0
      %834 = vmatpush1.xpose.msra.mxu0 %v801
      %835 = vmatprep.subr.mxu0 0.0
      %836 = vmatpush1.xpose.msra.mxu0 %v803
      %837 = vmatprep.subr.mxu0 0.0
      %838 = vmatpush1.xpose.msra.mxu0 %v805
      %839 = vmatprep.subr.mxu0 0.0
      %840 = vmatpush1.xpose.msra.mxu0 %v807
      %841 = vmatprep.subr.mxu0 0.0
      %842 = vmatpush1.xpose.msra.mxu0 %v809
      %843 = vmatprep.subr.mxu0 0.0
      %844 = vmatpush1.xpose.msra.mxu0 %v811
      %845 = vmatprep.subr.mxu0 0.0
      %846 = vmatpush1.xpose.msra.mxu0 %v813
      %847 = vmatprep.subr.mxu0 0.0
      %848 = vmatpush1.xpose.msra.mxu0 %v815
      %849 = vmatprep.subr.mxu0 0.0
      %850 = vmatpush1.xpose.msra.mxu0 %v817
      %851 = vmatprep.subr.mxu0 0.0
      %852 = vmatpush1.xpose.msra.mxu0 %v819
      %853 = vmatprep.subr.mxu0 0.0
      %854 = vmatpush1.xpose.msra.mxu0 %v821
      %855 = vmatprep.subr.mxu0 0.0
      %856 = vmatpush1.xpose.msra.mxu0 %v823
      %857 = vmatprep.subr.mxu0 0.0
      %858 = vmatpush1.xpose.msra.mxu0 0.0
      %859 = vmatprep.subr.mxu0 0.0
      %860 = vmatpush1.xpose.msra.mxu0 0.0
      %861 = vmatprep.subr.mxu0 0.0
      %862 = vmatpush1.xpose.msra.mxu0 0.0
      %863 = vmatprep.subr.mxu0 0.0
      %864 = vmatpush1.xpose.msra.mxu0 0.0
      %865 = vmatprep.subr.mxu0 0.0
      %866 = vmatpush1.xpose.msra.mxu0 0.0
      %867 = vmatprep.subr.mxu0 0.0
      %868 = vmatpush1.xpose.msra.mxu0 0.0
      %869 = vmatprep.subr.mxu0 0.0
      %870 = vmatpush1.xpose.msra.mxu0 0.0
      %871 = vmatprep.subr.mxu0 0.0
      %872 = vmatpush1.xpose.msra.mxu0 0.0
      %873 = vmatprep.subr.mxu0 0.0
      %874 = vmatpush1.xpose.msra.mxu0 0.0
      %875 = vmatprep.subr.mxu0 0.0
      %876 = vmatpush1.xpose.msra.mxu0 0.0
      %877 = vmatprep.subr.mxu0 0.0
      %878 = vmatpush1.xpose.msra.mxu0 0.0
      %879 = vmatprep.subr.mxu0 0.0
      %880 = vmatpush1.xpose.msra.mxu0 0.0
      %881 = vmatprep.subr.mxu0 0.0
      %882 = vmatpush1.xpose.msra.mxu0 0.0
      %883 = vmatprep.subr.mxu0 0.0
      %884 = vmatpush1.xpose.msra.mxu0 0.0
      %885 = vmatprep.subr.mxu0 0.0
      %886 = vmatpush1.xpose.msra.mxu0 0.0
      %887 = vmatprep.subr.mxu0 0.0
      %888 = vmatpush1.xpose.msra.mxu0 0.0
      %889 = vmatprep.mubr.f32.mxu0 0.0
      %890 = vmatmul.mubr.f32.gmra.mrb[0].mxu0 %v761
      %v891 = vpop.f32.mrb[0].mxu0
      %v892 = vadd.f32 %v696, %v891
      %v893 = vpop.f32.mrb[0].mxu0
      %894 = vmatprep.mubr.f32.mxu0 0.0
      %895 = vmatmul.mubr.f32.gmra.mrb[0].mxu0 %v763
      %v896 = vpop.f32.mrb[0].mxu0
      %v897 = vadd.f32 %v697, %v896
      %v898 = vpop.f32.mrb[0].mxu0
      %899 = vmatprep.mubr.f32.mxu0 0.0
      %900 = vmatmul.mubr.f32.gmra.mrb[0].mxu0 %v765
      %v901 = vpop.f32.mrb[0].mxu0
      %v902 = vadd.f32 %v698, %v901
      %v903 = vpop.f32.mrb[0].mxu0
      %904 = vmatprep.mubr.f32.mxu0 0.0
      %905 = vmatmul.mubr.f32.gmra.mrb[0].mxu0 %v767
      %v906 = vpop.f32.mrb[0].mxu0
      %v907 = vadd.f32 %v699, %v906
      %v908 = vpop.f32.mrb[0].mxu0
      %909 = vmatprep.mubr.f32.mxu0 0.0
      %910 = vmatmul.mubr.f32.gmra.mrb[0].mxu0 %v769
      %v911 = vpop.f32.mrb[0].mxu0
      %v912 = vadd.f32 %v700, %v911
      %v913 = vpop.f32.mrb[0].mxu0
      %914 = vmatprep.mubr.f32.mxu0 0.0
      %915 = vmatmul.mubr.f32.gmra.mrb[0].mxu0 %v771
      %v916 = vpop.f32.mrb[0].mxu0
      %v917 = vadd.f32 %v701, %v916
      %v918 = vpop.f32.mrb[0].mxu0
      %919 = vmatprep.mubr.f32.mxu0 0.0
      %920 = vmatmul.mubr.f32.gmra.mrb[0].mxu0 %v773
      %v921 = vpop.f32.mrb[0].mxu0
      %v922 = vadd.f32 %v702, %v921
      %v923 = vpop.f32.mrb[0].mxu0
      %924 = vmatprep.mubr.f32.mxu0 0.0
      %925 = vmatmul.mubr.f32.gmra.mrb[0].mxu0 %v775
      %v926 = vpop.f32.mrb[0].mxu0
      %v927 = vadd.f32 %v703, %v926
      %v928 = vpop.f32.mrb[0].mxu0
      %929 = vmatprep.mubr.f32.mxu0 0.0
      %930 = vmatmul.mubr.f32.gmra.mrb[0].mxu0 %v777
      %v931 = vpop.f32.mrb[0].mxu0
      %v932 = vadd.f32 %v704, %v931
      %v933 = vpop.f32.mrb[0].mxu0
      %934 = vmatprep.mubr.f32.mxu0 0.0
      %935 = vmatmul.mubr.f32.gmra.mrb[0].mxu0 %v779
      %v936 = vpop.f32.mrb[0].mxu0
      %v937 = vadd.f32 %v705, %v936
      %v938 = vpop.f32.mrb[0].mxu0
      %939 = vmatprep.mubr.f32.mxu0 0.0
      %940 = vmatmul.mubr.f32.gmra.mrb[0].mxu0 %v781
      %v941 = vpop.f32.mrb[0].mxu0
      %v942 = vadd.f32 %v706, %v941
      %v943 = vpop.f32.mrb[0].mxu0
      %944 = vmatprep.mubr.f32.mxu0 0.0
      %945 = vmatmul.mubr.f32.gmra.mrb[0].mxu0 %v783
      %v946 = vpop.f32.mrb[0].mxu0
      %v947 = vadd.f32 %v707, %v946
      %v948 = vpop.f32.mrb[0].mxu0
      %949 = vmatprep.mubr.f32.mxu0 0.0
      %950 = vmatmul.mubr.f32.gmra.mrb[0].mxu0 %v785
      %v951 = vpop.f32.mrb[0].mxu0
      %v952 = vadd.f32 %v708, %v951
      %v953 = vpop.f32.mrb[0].mxu0
      %954 = vmatprep.mubr.f32.mxu0 0.0
      %955 = vmatmul.mubr.f32.gmra.mrb[0].mxu0 %v787
      %v956 = vpop.f32.mrb[0].mxu0
      %v957 = vadd.f32 %v709, %v956
      %v958 = vpop.f32.mrb[0].mxu0
      %959 = vmatprep.mubr.f32.mxu0 0.0
      %960 = vmatmul.mubr.f32.gmra.mrb[0].mxu0 %v789
      %v961 = vpop.f32.mrb[0].mxu0
      %v962 = vadd.f32 %v710, %v961
      %v963 = vpop.f32.mrb[0].mxu0
      %964 = vmatprep.mubr.f32.mxu0 0.0
      %965 = vmatmul.mubr.f32.gmra.mrb[0].mxu0 %v791
      %v966 = vpop.f32.mrb[0].mxu0
      %v967 = vadd.f32 %v711, %v966
      %v968 = vpop.f32.mrb[0].mxu0
      %969 = vdwg.mxu0
      %970 = vmax.xlane.f32.xlu0 %v892
      %v971 = vpop.xlane.xlu0 %970
      %972 = vmax.xlane.f32.xlu0 %v897
      %v973 = vpop.xlane.xlu0 %972
      %974 = vmax.xlane.f32.xlu0 %v902
      %v975 = vpop.xlane.xlu0 %974
      %976 = vmax.xlane.f32.xlu0 %v907
      %v977 = vpop.xlane.xlu0 %976
      %978 = vmax.xlane.f32.xlu0 %v912
      %v979 = vpop.xlane.xlu0 %978
      %980 = vmax.xlane.f32.xlu0 %v917
      %v981 = vpop.xlane.xlu0 %980
      %982 = vmax.xlane.f32.xlu0 %v922
      %v983 = vpop.xlane.xlu0 %982
      %984 = vmax.xlane.f32.xlu0 %v927
      %v985 = vpop.xlane.xlu0 %984
      %986 = vmax.xlane.f32.xlu0 %v932
      %v987 = vpop.xlane.xlu0 %986
      %988 = vmax.xlane.f32.xlu0 %v937
      %v989 = vpop.xlane.xlu0 %988
      %990 = vmax.xlane.f32.xlu0 %v942
      %v991 = vpop.xlane.xlu0 %990
      %992 = vmax.xlane.f32.xlu0 %v947
      %v993 = vpop.xlane.xlu0 %992
      %994 = vmax.xlane.f32.xlu0 %v952
      %v995 = vpop.xlane.xlu0 %994
      %996 = vmax.xlane.f32.xlu0 %v957
      %v997 = vpop.xlane.xlu0 %996
      %998 = vmax.xlane.f32.xlu0 %v962
      %v999 = vpop.xlane.xlu0 %998
      %1000 = vmax.xlane.f32.xlu0 %v967
      %v1001 = vpop.xlane.xlu0 %1000
      %v1002 = vsub.f32 %v892, %v971
      %v1003 = vsub.f32 %v897, %v973
      %v1004 = vsub.f32 %v902, %v975
      %v1005 = vsub.f32 %v907, %v977
      %v1006 = vsub.f32 %v912, %v979
      %v1007 = vsub.f32 %v917, %v981
      %v1008 = vsub.f32 %v922, %v983
      %v1009 = vsub.f32 %v927, %v985
      %v1010 = vsub.f32 %v932, %v987
      %v1011 = vsub.f32 %v937, %v989
      %v1012 = vsub.f32 %v942, %v991
      %v1013 = vsub.f32 %v947, %v993
      %v1014 = vsub.f32 %v952, %v995
      %v1015 = vsub.f32 %v957, %v997
      %v1016 = vsub.f32 %v962, %v999
      %v1017 = vsub.f32 %v967, %v1001
      %v1018 = vmul.f32 %v1002, 1.442695
      %v1019 = vpow.pop %v1018
      %v1020 = vmul.f32 %v1003, 1.442695
      %v1021 = vpow.pop %v1020
      %v1022 = vmul.f32 %v1004, 1.442695
      %v1023 = vpow.pop %v1022
      %v1024 = vmul.f32 %v1005, 1.442695
      %v1025 = vpow.pop %v1024
      %v1026 = vmul.f32 %v1006, 1.442695
      %v1027 = vpow.pop %v1026
      %v1028 = vmul.f32 %v1007, 1.442695
      %v1029 = vpow.pop %v1028
      %v1030 = vmul.f32 %v1008, 1.442695
      %v1031 = vpow.pop %v1030
      %v1032 = vmul.f32 %v1009, 1.442695
      %v1033 = vpow.pop %v1032
      %v1034 = vmul.f32 %v1010, 1.442695
      %v1035 = vpow.pop %v1034
      %v1036 = vmul.f32 %v1011, 1.442695
      %v1037 = vpow.pop %v1036
      %v1038 = vmul.f32 %v1012, 1.442695
      %v1039 = vpow.pop %v1038
      %v1040 = vmul.f32 %v1013, 1.442695
      %v1041 = vpow.pop %v1040
      %v1042 = vmul.f32 %v1014, 1.442695
      %v1043 = vpow.pop %v1042
      %v1044 = vmul.f32 %v1015, 1.442695
      %v1045 = vpow.pop %v1044
      %v1046 = vmul.f32 %v1016, 1.442695
      %v1047 = vpow.pop %v1046
      %v1048 = vmul.f32 %v1017, 1.442695
      %v1049 = vpow.pop %v1048
      %1050 = vadd.xlane.f32.xlu0 %v1019
      %v1051 = vpop.xlane.xlu0 %1050
      %1052 = vadd.xlane.f32.xlu0 %v1021
      %v1053 = vpop.xlane.xlu0 %1052
      %1054 = vadd.xlane.f32.xlu0 %v1023
      %v1055 = vpop.xlane.xlu0 %1054
      %1056 = vadd.xlane.f32.xlu0 %v1025
      %v1057 = vpop.xlane.xlu0 %1056
      %1058 = vadd.xlane.f32.xlu0 %v1027
      %v1059 = vpop.xlane.xlu0 %1058
      %1060 = vadd.xlane.f32.xlu0 %v1029
      %v1061 = vpop.xlane.xlu0 %1060
      %1062 = vadd.xlane.f32.xlu0 %v1031
      %v1063 = vpop.xlane.xlu0 %1062
      %1064 = vadd.xlane.f32.xlu0 %v1033
      %v1065 = vpop.xlane.xlu0 %1064
      %1066 = vadd.xlane.f32.xlu0 %v1035
      %v1067 = vpop.xlane.xlu0 %1066
      %1068 = vadd.xlane.f32.xlu0 %v1037
      %v1069 = vpop.xlane.xlu0 %1068
      %1070 = vadd.xlane.f32.xlu0 %v1039
      %v1071 = vpop.xlane.xlu0 %1070
      %1072 = vadd.xlane.f32.xlu0 %v1041
      %v1073 = vpop.xlane.xlu0 %1072
      %1074 = vadd.xlane.f32.xlu0 %v1043
      %v1075 = vpop.xlane.xlu0 %1074
      %1076 = vadd.xlane.f32.xlu0 %v1045
      %v1077 = vpop.xlane.xlu0 %1076
      %1078 = vadd.xlane.f32.xlu0 %v1047
      %v1079 = vpop.xlane.xlu0 %1078
      %1080 = vadd.xlane.f32.xlu0 %v1049
      %v1081 = vpop.xlane.xlu0 %1080
      %v1082 = vrcp.pop %v1051
      %v1083 = vrcp.pop %v1053
      %v1084 = vrcp.pop %v1055
      %v1085 = vrcp.pop %v1057
      %v1086 = vrcp.pop %v1059
      %v1087 = vrcp.pop %v1061
      %v1088 = vrcp.pop %v1063
      %v1089 = vrcp.pop %v1065
      %v1090 = vrcp.pop %v1067
      %v1091 = vrcp.pop %v1069
      %v1092 = vrcp.pop %v1071
      %v1093 = vrcp.pop %v1073
      %v1094 = vrcp.pop %v1075
      %v1095 = vrcp.pop %v1077
      %v1096 = vrcp.pop %v1079
      %v1097 = vrcp.pop %v1081
      %v1098 = vmul.f32 %v1019, %v1082
      %v1099 = vmul.f32 %v1021, %v1083
      %v1100 = vmul.f32 %v1023, %v1084
      %v1101 = vmul.f32 %v1025, %v1085
      %v1102 = vmul.f32 %v1027, %v1086
      %v1103 = vmul.f32 %v1029, %v1087
      %v1104 = vmul.f32 %v1031, %v1088
      %v1105 = vmul.f32 %v1033, %v1089
      %v1106 = vmul.f32 %v1035, %v1090
      %v1107 = vmul.f32 %v1037, %v1091
      %v1108 = vmul.f32 %v1039, %v1092
      %v1109 = vmul.f32 %v1041, %v1093
      %v1110 = vmul.f32 %v1043, %v1094
      %v1111 = vmul.f32 %v1045, %v1095
      %v1112 = vmul.f32 %v1047, %v1096
      %v1113 = vmul.f32 %v1049, %v1097
      %1114 = vrot.lane.b32.xlu0 %v680, 64
      %v1115 = vpop.permute.xlu0 %1114
      %1116 = vrot.lane.b32.xlu0 %v681, 64
      %v1117 = vpop.permute.xlu0 %1116
      %1118 = vrot.lane.b32.xlu0 %v682, 64
      %v1119 = vpop.permute.xlu0 %1118
      %1120 = vrot.lane.b32.xlu0 %v683, 64
      %v1121 = vpop.permute.xlu0 %1120
      %1122 = vrot.lane.b32.xlu0 %v684, 64
      %v1123 = vpop.permute.xlu0 %1122
      %1124 = vrot.lane.b32.xlu0 %v685, 64
      %v1125 = vpop.permute.xlu0 %1124
      %1126 = vrot.lane.b32.xlu0 %v686, 64
      %v1127 = vpop.permute.xlu0 %1126
      %1128 = vrot.lane.b32.xlu0 %v687, 64
      %v1129 = vpop.permute.xlu0 %1128
      %1130 = vrot.lane.b32.xlu0 %v688, 64
      %v1131 = vpop.permute.xlu0 %1130
      %1132 = vrot.lane.b32.xlu0 %v689, 64
      %v1133 = vpop.permute.xlu0 %1132
      %1134 = vrot.lane.b32.xlu0 %v690, 64
      %v1135 = vpop.permute.xlu0 %1134
      %1136 = vrot.lane.b32.xlu0 %v691, 64
      %v1137 = vpop.permute.xlu0 %1136
      %1138 = vrot.lane.b32.xlu0 %v692, 64
      %v1139 = vpop.permute.xlu0 %1138
      %1140 = vrot.lane.b32.xlu0 %v693, 64
      %v1141 = vpop.permute.xlu0 %1140
      %1142 = vrot.lane.b32.xlu0 %v694, 64
      %v1143 = vpop.permute.xlu0 %1142
      %1144 = vrot.lane.b32.xlu0 %v695, 64
      %v1145 = vpop.permute.xlu0 %1144
      %1162 = vmatprep.subr.mxu0 0.0
      %1163 = vmatpush1.msra.mxu0 %v1115
      %1164 = vmatprep.subr.mxu0 0.0
      %1165 = vmatpush1.msra.mxu0 %v1117
      %1166 = vmatprep.subr.mxu0 0.0
      %1167 = vmatpush1.msra.mxu0 %v1119
      %1168 = vmatprep.subr.mxu0 0.0
      %1169 = vmatpush1.msra.mxu0 %v1121
      %1170 = vmatprep.subr.mxu0 0.0
      %1171 = vmatpush1.msra.mxu0 %v1123
      %1172 = vmatprep.subr.mxu0 0.0
      %1173 = vmatpush1.msra.mxu0 %v1125
      %1174 = vmatprep.subr.mxu0 0.0
      %1175 = vmatpush1.msra.mxu0 %v1127
      %1176 = vmatprep.subr.mxu0 0.0
      %1177 = vmatpush1.msra.mxu0 %v1129
      %1178 = vmatprep.subr.mxu0 0.0
      %1179 = vmatpush1.msra.mxu0 %v1131
      %1180 = vmatprep.subr.mxu0 0.0
      %1181 = vmatpush1.msra.mxu0 %v1133
      %1182 = vmatprep.subr.mxu0 0.0
      %1183 = vmatpush1.msra.mxu0 %v1135
      %1184 = vmatprep.subr.mxu0 0.0
      %1185 = vmatpush1.msra.mxu0 %v1137
      %1186 = vmatprep.subr.mxu0 0.0
      %1187 = vmatpush1.msra.mxu0 %v1139
      %1188 = vmatprep.subr.mxu0 0.0
      %1189 = vmatpush1.msra.mxu0 %v1141
      %1190 = vmatprep.subr.mxu0 0.0
      %1191 = vmatpush1.msra.mxu0 %v1143
      %1192 = vmatprep.subr.mxu0 0.0
      %1193 = vmatpush1.msra.mxu0 %v1145
      %1194 = vmatprep.subr.mxu0 0.0
      %1195 = vmatpush1.msra.mxu0 0.0
      %1196 = vmatprep.subr.mxu0 0.0
      %1197 = vmatpush1.msra.mxu0 0.0
      %1198 = vmatprep.subr.mxu0 0.0
      %1199 = vmatpush1.msra.mxu0 0.0
      %1200 = vmatprep.subr.mxu0 0.0
      %1201 = vmatpush1.msra.mxu0 0.0
      %1202 = vmatprep.subr.mxu0 0.0
      %1203 = vmatpush1.msra.mxu0 0.0
      %1204 = vmatprep.subr.mxu0 0.0
      %1205 = vmatpush1.msra.mxu0 0.0
      %1206 = vmatprep.subr.mxu0 0.0
      %1207 = vmatpush1.msra.mxu0 0.0
      %1208 = vmatprep.subr.mxu0 0.0
      %1209 = vmatpush1.msra.mxu0 0.0
      %1210 = vmatprep.subr.mxu0 0.0
      %1211 = vmatpush1.msra.mxu0 0.0
      %1212 = vmatprep.subr.mxu0 0.0
      %1213 = vmatpush1.msra.mxu0 0.0
      %1214 = vmatprep.subr.mxu0 0.0
      %1215 = vmatpush1.msra.mxu0 0.0
      %1216 = vmatprep.subr.mxu0 0.0
      %1217 = vmatpush1.msra.mxu0 0.0
      %1218 = vmatprep.subr.mxu0 0.0
      %1219 = vmatpush1.msra.mxu0 0.0
      %1220 = vmatprep.subr.mxu0 0.0
      %1221 = vmatpush1.msra.mxu0 0.0
      %1222 = vmatprep.subr.mxu0 0.0
      %1223 = vmatpush1.msra.mxu0 0.0
      %1224 = vmatprep.subr.mxu0 0.0
      %1225 = vmatpush1.msra.mxu0 0.0
      %1226 = vmatprep.mubr.f32.mxu0 0.0
      %1227 = vmatmul.mubr.f32.gmra.mrb[0].mxu0 %v1098
      %v1228 = vpop.f32.mrb[0].mxu0
      %v1229 = vadd.f32 0.0, %v1228
      %v1230 = vpop.f32.mrb[0].mxu0
      %1231 = vmatprep.mubr.f32.mxu0 0.0
      %1232 = vmatmul.mubr.f32.gmra.mrb[0].mxu0 %v1099
      %v1233 = vpop.f32.mrb[0].mxu0
      %v1234 = vadd.f32 0.0, %v1233
      %v1235 = vpop.f32.mrb[0].mxu0
      %1236 = vmatprep.mubr.f32.mxu0 0.0
      %1237 = vmatmul.mubr.f32.gmra.mrb[0].mxu0 %v1100
      %v1238 = vpop.f32.mrb[0].mxu0
      %v1239 = vadd.f32 0.0, %v1238
      %v1240 = vpop.f32.mrb[0].mxu0
      %1241 = vmatprep.mubr.f32.mxu0 0.0
      %1242 = vmatmul.mubr.f32.gmra.mrb[0].mxu0 %v1101
      %v1243 = vpop.f32.mrb[0].mxu0
      %v1244 = vadd.f32 0.0, %v1243
      %v1245 = vpop.f32.mrb[0].mxu0
      %1246 = vmatprep.mubr.f32.mxu0 0.0
      %1247 = vmatmul.mubr.f32.gmra.mrb[0].mxu0 %v1102
      %v1248 = vpop.f32.mrb[0].mxu0
      %v1249 = vadd.f32 0.0, %v1248
      %v1250 = vpop.f32.mrb[0].mxu0
      %1251 = vmatprep.mubr.f32.mxu0 0.0
      %1252 = vmatmul.mubr.f32.gmra.mrb[0].mxu0 %v1103
      %v1253 = vpop.f32.mrb[0].mxu0
      %v1254 = vadd.f32 0.0, %v1253
      %v1255 = vpop.f32.mrb[0].mxu0
      %1256 = vmatprep.mubr.f32.mxu0 0.0
      %1257 = vmatmul.mubr.f32.gmra.mrb[0].mxu0 %v1104
      %v1258 = vpop.f32.mrb[0].mxu0
      %v1259 = vadd.f32 0.0, %v1258
      %v1260 = vpop.f32.mrb[0].mxu0
      %1261 = vmatprep.mubr.f32.mxu0 0.0
      %1262 = vmatmul.mubr.f32.gmra.mrb[0].mxu0 %v1105
      %v1263 = vpop.f32.mrb[0].mxu0
      %v1264 = vadd.f32 0.0, %v1263
      %v1265 = vpop.f32.mrb[0].mxu0
      %1266 = vmatprep.mubr.f32.mxu0 0.0
      %1267 = vmatmul.mubr.f32.gmra.mrb[0].mxu0 %v1106
      %v1268 = vpop.f32.mrb[0].mxu0
      %v1269 = vadd.f32 0.0, %v1268
      %v1270 = vpop.f32.mrb[0].mxu0
      %1271 = vmatprep.mubr.f32.mxu0 0.0
      %1272 = vmatmul.mubr.f32.gmra.mrb[0].mxu0 %v1107
      %v1273 = vpop.f32.mrb[0].mxu0
      %v1274 = vadd.f32 0.0, %v1273
      %v1275 = vpop.f32.mrb[0].mxu0
      %1276 = vmatprep.mubr.f32.mxu0 0.0
      %1277 = vmatmul.mubr.f32.gmra.mrb[0].mxu0 %v1108
      %v1278 = vpop.f32.mrb[0].mxu0
      %v1279 = vadd.f32 0.0, %v1278
      %v1280 = vpop.f32.mrb[0].mxu0
      %1281 = vmatprep.mubr.f32.mxu0 0.0
      %1282 = vmatmul.mubr.f32.gmra.mrb[0].mxu0 %v1109
      %v1283 = vpop.f32.mrb[0].mxu0
      %v1284 = vadd.f32 0.0, %v1283
      %v1285 = vpop.f32.mrb[0].mxu0
      %1286 = vmatprep.mubr.f32.mxu0 0.0
      %1287 = vmatmul.mubr.f32.gmra.mrb[0].mxu0 %v1110
      %v1288 = vpop.f32.mrb[0].mxu0
      %v1289 = vadd.f32 0.0, %v1288
      %v1290 = vpop.f32.mrb[0].mxu0
      %1291 = vmatprep.mubr.f32.mxu0 0.0
      %1292 = vmatmul.mubr.f32.gmra.mrb[0].mxu0 %v1111
      %v1293 = vpop.f32.mrb[0].mxu0
      %v1294 = vadd.f32 0.0, %v1293
      %v1295 = vpop.f32.mrb[0].mxu0
      %1296 = vmatprep.mubr.f32.mxu0 0.0
      %1297 = vmatmul.mubr.f32.gmra.mrb[0].mxu0 %v1112
      %v1298 = vpop.f32.mrb[0].mxu0
      %v1299 = vadd.f32 0.0, %v1298
      %v1300 = vpop.f32.mrb[0].mxu0
      %1301 = vmatprep.mubr.f32.mxu0 0.0
      %1302 = vmatmul.mubr.f32.gmra.mrb[0].mxu0 %v1113
      %v1303 = vpop.f32.mrb[0].mxu0
      %v1304 = vadd.f32 0.0, %v1303
      %v1305 = vpop.f32.mrb[0].mxu0
      %1306 = vdwg.mxu0
      %1307 = vrot.lane.b32.xlu0 %v680, 112
      %v1308 = vpop.permute.xlu0 %1307
      %1309 = vrot.lane.b32.xlu0 %v681, 112
      %v1310 = vpop.permute.xlu0 %1309
      %1311 = vrot.lane.b32.xlu0 %v682, 112
      %v1312 = vpop.permute.xlu0 %1311
      %1313 = vrot.lane.b32.xlu0 %v683, 112
      %v1314 = vpop.permute.xlu0 %1313
      %1315 = vrot.lane.b32.xlu0 %v684, 112
      %v1316 = vpop.permute.xlu0 %1315
      %1317 = vrot.lane.b32.xlu0 %v685, 112
      %v1318 = vpop.permute.xlu0 %1317
      %1319 = vrot.lane.b32.xlu0 %v686, 112
      %v1320 = vpop.permute.xlu0 %1319
      %1321 = vrot.lane.b32.xlu0 %v687, 112
      %v1322 = vpop.permute.xlu0 %1321
      %1323 = vrot.lane.b32.xlu0 %v688, 112
      %v1324 = vpop.permute.xlu0 %1323
      %1325 = vrot.lane.b32.xlu0 %v689, 112
      %v1326 = vpop.permute.xlu0 %1325
      %1327 = vrot.lane.b32.xlu0 %v690, 112
      %v1328 = vpop.permute.xlu0 %1327
      %1329 = vrot.lane.b32.xlu0 %v691, 112
      %v1330 = vpop.permute.xlu0 %1329
      %1331 = vrot.lane.b32.xlu0 %v692, 112
      %v1332 = vpop.permute.xlu0 %1331
      %1333 = vrot.lane.b32.xlu0 %v693, 112
      %v1334 = vpop.permute.xlu0 %1333
      %1335 = vrot.lane.b32.xlu0 %v694, 112
      %v1336 = vpop.permute.xlu0 %1335
      %1337 = vrot.lane.b32.xlu0 %v695, 112
      %v1338 = vpop.permute.xlu0 %1337
      %1339 = vrot.lane.b32.xlu0 %v680, 80
      %v1340 = vpop.permute.xlu0 %1339
      %1341 = vrot.lane.b32.xlu0 %v681, 80
      %v1342 = vpop.permute.xlu0 %1341
      %1343 = vrot.lane.b32.xlu0 %v682, 80
      %v1344 = vpop.permute.xlu0 %1343
      %1345 = vrot.lane.b32.xlu0 %v683, 80
      %v1346 = vpop.permute.xlu0 %1345
      %1347 = vrot.lane.b32.xlu0 %v684, 80
      %v1348 = vpop.permute.xlu0 %1347
      %1349 = vrot.lane.b32.xlu0 %v685, 80
      %v1350 = vpop.permute.xlu0 %1349
      %1351 = vrot.lane.b32.xlu0 %v686, 80
      %v1352 = vpop.permute.xlu0 %1351
      %1353 = vrot.lane.b32.xlu0 %v687, 80
      %v1354 = vpop.permute.xlu0 %1353
      %1355 = vrot.lane.b32.xlu0 %v688, 80
      %v1356 = vpop.permute.xlu0 %1355
      %1357 = vrot.lane.b32.xlu0 %v689, 80
      %v1358 = vpop.permute.xlu0 %1357
      %1359 = vrot.lane.b32.xlu0 %v690, 80
      %v1360 = vpop.permute.xlu0 %1359
      %1361 = vrot.lane.b32.xlu0 %v691, 80
      %v1362 = vpop.permute.xlu0 %1361
      %1363 = vrot.lane.b32.xlu0 %v692, 80
      %v1364 = vpop.permute.xlu0 %1363
      %1365 = vrot.lane.b32.xlu0 %v693, 80
      %v1366 = vpop.permute.xlu0 %1365
      %1367 = vrot.lane.b32.xlu0 %v694, 80
      %v1368 = vpop.permute.xlu0 %1367
      %1369 = vrot.lane.b32.xlu0 %v695, 80
      %v1370 = vpop.permute.xlu0 %1369
      %v1371 = vsel %vm760, %v1308, 0
      %v1373 = vsel %vm760, %v1310, 0
      %v1375 = vsel %vm760, %v1312, 0
      %v1377 = vsel %vm760, %v1314, 0
      %v1379 = vsel %vm760, %v1316, 0
      %v1381 = vsel %vm760, %v1318, 0
      %v1383 = vsel %vm760, %v1320, 0
      %v1385 = vsel %vm760, %v1322, 0
      %v1387 = vsel %vm760, %v1324, 0
      %v1389 = vsel %vm760, %v1326, 0
      %v1391 = vsel %vm760, %v1328, 0
      %v1393 = vsel %vm760, %v1330, 0
      %v1395 = vsel %vm760, %v1332, 0
      %v1397 = vsel %vm760, %v1334, 0
      %v1399 = vsel %vm760, %v1336, 0
      %v1401 = vsel %vm760, %v1338, 0
      %v1403 = vsel %vm760, %v1340, 0
      %v1405 = vsel %vm760, %v1342, 0
      %v1407 = vsel %vm760, %v1344, 0
      %v1409 = vsel %vm760, %v1346, 0
      %v1411 = vsel %vm760, %v1348, 0
      %v1413 = vsel %vm760, %v1350, 0
      %v1415 = vsel %vm760, %v1352, 0
      %v1417 = vsel %vm760, %v1354, 0
      %v1419 = vsel %vm760, %v1356, 0
      %v1421 = vsel %vm760, %v1358, 0
      %v1423 = vsel %vm760, %v1360, 0
      %v1425 = vsel %vm760, %v1362, 0
      %v1427 = vsel %vm760, %v1364, 0
      %v1429 = vsel %vm760, %v1366, 0
      %v1431 = vsel %vm760, %v1368, 0
      %v1433 = vsel %vm760, %v1370, 0
      %1435 = vmatprep.subr.mxu0 0.0
      %1436 = vmatpush1.xpose.msra.mxu0 %v1403
      %1437 = vmatprep.subr.mxu0 0.0
      %1438 = vmatpush1.xpose.msra.mxu0 %v1405
      %1439 = vmatprep.subr.mxu0 0.0
      %1440 = vmatpush1.xpose.msra.mxu0 %v1407
      %1441 = vmatprep.subr.mxu0 0.0
      %1442 = vmatpush1.xpose.msra.mxu0 %v1409
      %1443 = vmatprep.subr.mxu0 0.0
      %1444 = vmatpush1.xpose.msra.mxu0 %v1411
      %1445 = vmatprep.subr.mxu0 0.0
      %1446 = vmatpush1.xpose.msra.mxu0 %v1413
      %1447 = vmatprep.subr.mxu0 0.0
      %1448 = vmatpush1.xpose.msra.mxu0 %v1415
      %1449 = vmatprep.subr.mxu0 0.0
      %1450 = vmatpush1.xpose.msra.mxu0 %v1417
      %1451 = vmatprep.subr.mxu0 0.0
      %1452 = vmatpush1.xpose.msra.mxu0 %v1419
      %1453 = vmatprep.subr.mxu0 0.0
      %1454 = vmatpush1.xpose.msra.mxu0 %v1421
      %1455 = vmatprep.subr.mxu0 0.0
      %1456 = vmatpush1.xpose.msra.mxu0 %v1423
      %1457 = vmatprep.subr.mxu0 0.0
      %1458 = vmatpush1.xpose.msra.mxu0 %v1425
      %1459 = vmatprep.subr.mxu0 0.0
      %1460 = vmatpush1.xpose.msra.mxu0 %v1427
      %1461 = vmatprep.subr.mxu0 0.0
      %1462 = vmatpush1.xpose.msra.mxu0 %v1429
      %1463 = vmatprep.subr.mxu0 0.0
      %1464 = vmatpush1.xpose.msra.mxu0 %v1431
      %1465 = vmatprep.subr.mxu0 0.0
      %1466 = vmatpush1.xpose.msra.mxu0 %v1433
      %1467 = vmatprep.subr.mxu0 0.0
      %1468 = vmatpush1.xpose.msra.mxu0 0.0
      %1469 = vmatprep.subr.mxu0 0.0
      %1470 = vmatpush1.xpose.msra.mxu0 0.0
      %1471 = vmatprep.subr.mxu0 0.0
      %1472 = vmatpush1.xpose.msra.mxu0 0.0
      %1473 = vmatprep.subr.mxu0 0.0
      %1474 = vmatpush1.xpose.msra.mxu0 0.0
      %1475 = vmatprep.subr.mxu0 0.0
      %1476 = vmatpush1.xpose.msra.mxu0 0.0
      %1477 = vmatprep.subr.mxu0 0.0
      %1478 = vmatpush1.xpose.msra.mxu0 0.0
      %1479 = vmatprep.subr.mxu0 0.0
      %1480 = vmatpush1.xpose.msra.mxu0 0.0
      %1481 = vmatprep.subr.mxu0 0.0
      %1482 = vmatpush1.xpose.msra.mxu0 0.0
      %1483 = vmatprep.subr.mxu0 0.0
      %1484 = vmatpush1.xpose.msra.mxu0 0.0
      %1485 = vmatprep.subr.mxu0 0.0
      %1486 = vmatpush1.xpose.msra.mxu0 0.0
      %1487 = vmatprep.subr.mxu0 0.0
      %1488 = vmatpush1.xpose.msra.mxu0 0.0
      %1489 = vmatprep.subr.mxu0 0.0
      %1490 = vmatpush1.xpose.msra.mxu0 0.0
      %1491 = vmatprep.subr.mxu0 0.0
      %1492 = vmatpush1.xpose.msra.mxu0 0.0
      %1493 = vmatprep.subr.mxu0 0.0
      %1494 = vmatpush1.xpose.msra.mxu0 0.0
      %1495 = vmatprep.subr.mxu0 0.0
      %1496 = vmatpush1.xpose.msra.mxu0 0.0
      %1497 = vmatprep.subr.mxu0 0.0
      %1498 = vmatpush1.xpose.msra.mxu0 0.0
      %1499 = vmatprep.mubr.f32.mxu0 0.0
      %1500 = vmatmul.mubr.f32.gmra.mrb[0].mxu0 %v1371
      %v1501 = vpop.f32.mrb[0].mxu0
      %v1502 = vadd.f32 %v696, %v1501
      %v1503 = vpop.f32.mrb[0].mxu0
      %1504 = vmatprep.mubr.f32.mxu0 0.0
      %1505 = vmatmul.mubr.f32.gmra.mrb[0].mxu0 %v1373
      %v1506 = vpop.f32.mrb[0].mxu0
      %v1507 = vadd.f32 %v697, %v1506
      %v1508 = vpop.f32.mrb[0].mxu0
      %1509 = vmatprep.mubr.f32.mxu0 0.0
      %1510 = vmatmul.mubr.f32.gmra.mrb[0].mxu0 %v1375
      %v1511 = vpop.f32.mrb[0].mxu0
      %v1512 = vadd.f32 %v698, %v1511
      %v1513 = vpop.f32.mrb[0].mxu0
      %1514 = vmatprep.mubr.f32.mxu0 0.0
      %1515 = vmatmul.mubr.f32.gmra.mrb[0].mxu0 %v1377
      %v1516 = vpop.f32.mrb[0].mxu0
      %v1517 = vadd.f32 %v699, %v1516
      %v1518 = vpop.f32.mrb[0].mxu0
      %1519 = vmatprep.mubr.f32.mxu0 0.0
      %1520 = vmatmul.mubr.f32.gmra.mrb[0].mxu0 %v1379
      %v1521 = vpop.f32.mrb[0].mxu0
      %v1522 = vadd.f32 %v700, %v1521
      %v1523 = vpop.f32.mrb[0].mxu0
      %1524 = vmatprep.mubr.f32.mxu0 0.0
      %1525 = vmatmul.mubr.f32.gmra.mrb[0].mxu0 %v1381
      %v1526 = vpop.f32.mrb[0].mxu0
      %v1527 = vadd.f32 %v701, %v1526
      %v1528 = vpop.f32.mrb[0].mxu0
      %1529 = vmatprep.mubr.f32.mxu0 0.0
      %1530 = vmatmul.mubr.f32.gmra.mrb[0].mxu0 %v1383
      %v1531 = vpop.f32.mrb[0].mxu0
      %v1532 = vadd.f32 %v702, %v1531
      %v1533 = vpop.f32.mrb[0].mxu0
      %1534 = vmatprep.mubr.f32.mxu0 0.0
      %1535 = vmatmul.mubr.f32.gmra.mrb[0].mxu0 %v1385
      %v1536 = vpop.f32.mrb[0].mxu0
      %v1537 = vadd.f32 %v703, %v1536
      %v1538 = vpop.f32.mrb[0].mxu0
      %1539 = vmatprep.mubr.f32.mxu0 0.0
      %1540 = vmatmul.mubr.f32.gmra.mrb[0].mxu0 %v1387
      %v1541 = vpop.f32.mrb[0].mxu0
      %v1542 = vadd.f32 %v704, %v1541
      %v1543 = vpop.f32.mrb[0].mxu0
      %1544 = vmatprep.mubr.f32.mxu0 0.0
      %1545 = vmatmul.mubr.f32.gmra.mrb[0].mxu0 %v1389
      %v1546 = vpop.f32.mrb[0].mxu0
      %v1547 = vadd.f32 %v705, %v1546
      %v1548 = vpop.f32.mrb[0].mxu0
      %1549 = vmatprep.mubr.f32.mxu0 0.0
      %1550 = vmatmul.mubr.f32.gmra.mrb[0].mxu0 %v1391
      %v1551 = vpop.f32.mrb[0].mxu0
      %v1552 = vadd.f32 %v706, %v1551
      %v1553 = vpop.f32.mrb[0].mxu0
      %1554 = vmatprep.mubr.f32.mxu0 0.0
      %1555 = vmatmul.mubr.f32.gmra.mrb[0].mxu0 %v1393
      %v1556 = vpop.f32.mrb[0].mxu0
      %v1557 = vadd.f32 %v707, %v1556
      %v1558 = vpop.f32.mrb[0].mxu0
      %1559 = vmatprep.mubr.f32.mxu0 0.0
      %1560 = vmatmul.mubr.f32.gmra.mrb[0].mxu0 %v1395
      %v1561 = vpop.f32.mrb[0].mxu0
      %v1562 = vadd.f32 %v708, %v1561
      %v1563 = vpop.f32.mrb[0].mxu0
      %1564 = vmatprep.mubr.f32.mxu0 0.0
      %1565 = vmatmul.mubr.f32.gmra.mrb[0].mxu0 %v1397
      %v1566 = vpop.f32.mrb[0].mxu0
      %v1567 = vadd.f32 %v709, %v1566
      %v1568 = vpop.f32.mrb[0].mxu0
      %1569 = vmatprep.mubr.f32.mxu0 0.0
      %1570 = vmatmul.mubr.f32.gmra.mrb[0].mxu0 %v1399
      %v1571 = vpop.f32.mrb[0].mxu0
      %v1572 = vadd.f32 %v710, %v1571
      %v1573 = vpop.f32.mrb[0].mxu0
      %1574 = vmatprep.mubr.f32.mxu0 0.0
      %1575 = vmatmul.mubr.f32.gmra.mrb[0].mxu0 %v1401
      %v1576 = vpop.f32.mrb[0].mxu0
      %v1577 = vadd.f32 %v711, %v1576
      %v1578 = vpop.f32.mrb[0].mxu0
      %1579 = vdwg.mxu0
      %1580 = vmax.xlane.f32.xlu0 %v1502
      %v1581 = vpop.xlane.xlu0 %1580
      %1582 = vmax.xlane.f32.xlu0 %v1507
      %v1583 = vpop.xlane.xlu0 %1582
      %1584 = vmax.xlane.f32.xlu0 %v1512
      %v1585 = vpop.xlane.xlu0 %1584
      %1586 = vmax.xlane.f32.xlu0 %v1517
      %v1587 = vpop.xlane.xlu0 %1586
      %1588 = vmax.xlane.f32.xlu0 %v1522
      %v1589 = vpop.xlane.xlu0 %1588
      %1590 = vmax.xlane.f32.xlu0 %v1527
      %v1591 = vpop.xlane.xlu0 %1590
      %1592 = vmax.xlane.f32.xlu0 %v1532
      %v1593 = vpop.xlane.xlu0 %1592
      %1594 = vmax.xlane.f32.xlu0 %v1537
      %v1595 = vpop.xlane.xlu0 %1594
      %1596 = vmax.xlane.f32.xlu0 %v1542
      %v1597 = vpop.xlane.xlu0 %1596
      %1598 = vmax.xlane.f32.xlu0 %v1547
      %v1599 = vpop.xlane.xlu0 %1598
      %1600 = vmax.xlane.f32.xlu0 %v1552
      %v1601 = vpop.xlane.xlu0 %1600
      %1602 = vmax.xlane.f32.xlu0 %v1557
      %v1603 = vpop.xlane.xlu0 %1602
      %1604 = vmax.xlane.f32.xlu0 %v1562
      %v1605 = vpop.xlane.xlu0 %1604
      %1606 = vmax.xlane.f32.xlu0 %v1567
      %v1607 = vpop.xlane.xlu0 %1606
      %1608 = vmax.xlane.f32.xlu0 %v1572
      %v1609 = vpop.xlane.xlu0 %1608
      %1610 = vmax.xlane.f32.xlu0 %v1577
      %v1611 = vpop.xlane.xlu0 %1610
      %v1612 = vsub.f32 %v1502, %v1581
      %v1613 = vsub.f32 %v1507, %v1583
      %v1614 = vsub.f32 %v1512, %v1585
      %v1615 = vsub.f32 %v1517, %v1587
      %v1616 = vsub.f32 %v1522, %v1589
      %v1617 = vsub.f32 %v1527, %v1591
      %v1618 = vsub.f32 %v1532, %v1593
      %v1619 = vsub.f32 %v1537, %v1595
      %v1620 = vsub.f32 %v1542, %v1597
      %v1621 = vsub.f32 %v1547, %v1599
      %v1622 = vsub.f32 %v1552, %v1601
      %v1623 = vsub.f32 %v1557, %v1603
      %v1624 = vsub.f32 %v1562, %v1605
      %v1625 = vsub.f32 %v1567, %v1607
      %v1626 = vsub.f32 %v1572, %v1609
      %v1627 = vsub.f32 %v1577, %v1611
      %v1628 = vmul.f32 %v1612, 1.442695
      %v1629 = vpow.pop %v1628
      %v1630 = vmul.f32 %v1613, 1.442695
      %v1631 = vpow.pop %v1630
      %v1632 = vmul.f32 %v1614, 1.442695
      %v1633 = vpow.pop %v1632
      %v1634 = vmul.f32 %v1615, 1.442695
      %v1635 = vpow.pop %v1634
      %v1636 = vmul.f32 %v1616, 1.442695
      %v1637 = vpow.pop %v1636
      %v1638 = vmul.f32 %v1617, 1.442695
      %v1639 = vpow.pop %v1638
      %v1640 = vmul.f32 %v1618, 1.442695
      %v1641 = vpow.pop %v1640
      %v1642 = vmul.f32 %v1619, 1.442695
      %v1643 = vpow.pop %v1642
      %v1644 = vmul.f32 %v1620, 1.442695
      %v1645 = vpow.pop %v1644
      %v1646 = vmul.f32 %v1621, 1.442695
      %v1647 = vpow.pop %v1646
      %v1648 = vmul.f32 %v1622, 1.442695
      %v1649 = vpow.pop %v1648
      %v1650 = vmul.f32 %v1623, 1.442695
      %v1651 = vpow.pop %v1650
      %v1652 = vmul.f32 %v1624, 1.442695
      %v1653 = vpow.pop %v1652
      %v1654 = vmul.f32 %v1625, 1.442695
      %v1655 = vpow.pop %v1654
      %v1656 = vmul.f32 %v1626, 1.442695
      %v1657 = vpow.pop %v1656
      %v1658 = vmul.f32 %v1627, 1.442695
      %v1659 = vpow.pop %v1658
      %1660 = vadd.xlane.f32.xlu0 %v1629
      %v1661 = vpop.xlane.xlu0 %1660
      %1662 = vadd.xlane.f32.xlu0 %v1631
      %v1663 = vpop.xlane.xlu0 %1662
      %1664 = vadd.xlane.f32.xlu0 %v1633
      %v1665 = vpop.xlane.xlu0 %1664
      %1666 = vadd.xlane.f32.xlu0 %v1635
      %v1667 = vpop.xlane.xlu0 %1666
      %1668 = vadd.xlane.f32.xlu0 %v1637
      %v1669 = vpop.xlane.xlu0 %1668
      %1670 = vadd.xlane.f32.xlu0 %v1639
      %v1671 = vpop.xlane.xlu0 %1670
      %1672 = vadd.xlane.f32.xlu0 %v1641
      %v1673 = vpop.xlane.xlu0 %1672
      %1674 = vadd.xlane.f32.xlu0 %v1643
      %v1675 = vpop.xlane.xlu0 %1674
      %1676 = vadd.xlane.f32.xlu0 %v1645
      %v1677 = vpop.xlane.xlu0 %1676
      %1678 = vadd.xlane.f32.xlu0 %v1647
      %v1679 = vpop.xlane.xlu0 %1678
      %1680 = vadd.xlane.f32.xlu0 %v1649
      %v1681 = vpop.xlane.xlu0 %1680
      %1682 = vadd.xlane.f32.xlu0 %v1651
      %v1683 = vpop.xlane.xlu0 %1682
      %1684 = vadd.xlane.f32.xlu0 %v1653
      %v1685 = vpop.xlane.xlu0 %1684
      %1686 = vadd.xlane.f32.xlu0 %v1655
      %v1687 = vpop.xlane.xlu0 %1686
      %1688 = vadd.xlane.f32.xlu0 %v1657
      %v1689 = vpop.xlane.xlu0 %1688
      %1690 = vadd.xlane.f32.xlu0 %v1659
      %v1691 = vpop.xlane.xlu0 %1690
      %v1692 = vrcp.pop %v1661
      %v1693 = vrcp.pop %v1663
      %v1694 = vrcp.pop %v1665
      %v1695 = vrcp.pop %v1667
      %v1696 = vrcp.pop %v1669
      %v1697 = vrcp.pop %v1671
      %v1698 = vrcp.pop %v1673
      %v1699 = vrcp.pop %v1675
      %v1700 = vrcp.pop %v1677
      %v1701 = vrcp.pop %v1679
      %v1702 = vrcp.pop %v1681
      %v1703 = vrcp.pop %v1683
      %v1704 = vrcp.pop %v1685
      %v1705 = vrcp.pop %v1687
      %v1706 = vrcp.pop %v1689
      %v1707 = vrcp.pop %v1691
      %v1708 = vmul.f32 %v1629, %v1692
      %v1709 = vmul.f32 %v1631, %v1693
      %v1710 = vmul.f32 %v1633, %v1694
      %v1711 = vmul.f32 %v1635, %v1695
      %v1712 = vmul.f32 %v1637, %v1696
      %v1713 = vmul.f32 %v1639, %v1697
      %v1714 = vmul.f32 %v1641, %v1698
      %v1715 = vmul.f32 %v1643, %v1699
      %v1716 = vmul.f32 %v1645, %v1700
      %v1717 = vmul.f32 %v1647, %v1701
      %v1718 = vmul.f32 %v1649, %v1702
      %v1719 = vmul.f32 %v1651, %v1703
      %v1720 = vmul.f32 %v1653, %v1704
      %v1721 = vmul.f32 %v1655, %v1705
      %v1722 = vmul.f32 %v1657, %v1706
      %v1723 = vmul.f32 %v1659, %v1707
      %1724 = vrot.lane.b32.xlu0 %v680, 48
      %v1725 = vpop.permute.xlu0 %1724
      %1726 = vrot.lane.b32.xlu0 %v681, 48
      %v1727 = vpop.permute.xlu0 %1726
      %1728 = vrot.lane.b32.xlu0 %v682, 48
      %v1729 = vpop.permute.xlu0 %1728
      %1730 = vrot.lane.b32.xlu0 %v683, 48
      %v1731 = vpop.permute.xlu0 %1730
      %1732 = vrot.lane.b32.xlu0 %v684, 48
      %v1733 = vpop.permute.xlu0 %1732
      %1734 = vrot.lane.b32.xlu0 %v685, 48
      %v1735 = vpop.permute.xlu0 %1734
      %1736 = vrot.lane.b32.xlu0 %v686, 48
      %v1737 = vpop.permute.xlu0 %1736
      %1738 = vrot.lane.b32.xlu0 %v687, 48
      %v1739 = vpop.permute.xlu0 %1738
      %1740 = vrot.lane.b32.xlu0 %v688, 48
      %v1741 = vpop.permute.xlu0 %1740
      %1742 = vrot.lane.b32.xlu0 %v689, 48
      %v1743 = vpop.permute.xlu0 %1742
      %1744 = vrot.lane.b32.xlu0 %v690, 48
      %v1745 = vpop.permute.xlu0 %1744
      %1746 = vrot.lane.b32.xlu0 %v691, 48
      %v1747 = vpop.permute.xlu0 %1746
      %1748 = vrot.lane.b32.xlu0 %v692, 48
      %v1749 = vpop.permute.xlu0 %1748
      %1750 = vrot.lane.b32.xlu0 %v693, 48
      %v1751 = vpop.permute.xlu0 %1750
      %1752 = vrot.lane.b32.xlu0 %v694, 48
      %v1753 = vpop.permute.xlu0 %1752
      %1754 = vrot.lane.b32.xlu0 %v695, 48
      %v1755 = vpop.permute.xlu0 %1754
      %1772 = vmatprep.subr.mxu0 0.0
      %1773 = vmatpush1.msra.mxu0 %v1725
      %1774 = vmatprep.subr.mxu0 0.0
      %1775 = vmatpush1.msra.mxu0 %v1727
      %1776 = vmatprep.subr.mxu0 0.0
      %1777 = vmatpush1.msra.mxu0 %v1729
      %1778 = vmatprep.subr.mxu0 0.0
      %1779 = vmatpush1.msra.mxu0 %v1731
      %1780 = vmatprep.subr.mxu0 0.0
      %1781 = vmatpush1.msra.mxu0 %v1733
      %1782 = vmatprep.subr.mxu0 0.0
      %1783 = vmatpush1.msra.mxu0 %v1735
      %1784 = vmatprep.subr.mxu0 0.0
      %1785 = vmatpush1.msra.mxu0 %v1737
      %1786 = vmatprep.subr.mxu0 0.0
      %1787 = vmatpush1.msra.mxu0 %v1739
      %1788 = vmatprep.subr.mxu0 0.0
      %1789 = vmatpush1.msra.mxu0 %v1741
      %1790 = vmatprep.subr.mxu0 0.0
      %1791 = vmatpush1.msra.mxu0 %v1743
      %1792 = vmatprep.subr.mxu0 0.0
      %1793 = vmatpush1.msra.mxu0 %v1745
      %1794 = vmatprep.subr.mxu0 0.0
      %1795 = vmatpush1.msra.mxu0 %v1747
      %1796 = vmatprep.subr.mxu0 0.0
      %1797 = vmatpush1.msra.mxu0 %v1749
      %1798 = vmatprep.subr.mxu0 0.0
      %1799 = vmatpush1.msra.mxu0 %v1751
      %1800 = vmatprep.subr.mxu0 0.0
      %1801 = vmatpush1.msra.mxu0 %v1753
      %1802 = vmatprep.subr.mxu0 0.0
      %1803 = vmatpush1.msra.mxu0 %v1755
      %1804 = vmatprep.subr.mxu0 0.0
      %1805 = vmatpush1.msra.mxu0 0.0
      %1806 = vmatprep.subr.mxu0 0.0
      %1807 = vmatpush1.msra.mxu0 0.0
      %1808 = vmatprep.subr.mxu0 0.0
      %1809 = vmatpush1.msra.mxu0 0.0
      %1810 = vmatprep.subr.mxu0 0.0
      %1811 = vmatpush1.msra.mxu0 0.0
      %1812 = vmatprep.subr.mxu0 0.0
      %1813 = vmatpush1.msra.mxu0 0.0
      %1814 = vmatprep.subr.mxu0 0.0
      %1815 = vmatpush1.msra.mxu0 0.0
      %1816 = vmatprep.subr.mxu0 0.0
      %1817 = vmatpush1.msra.mxu0 0.0
      %1818 = vmatprep.subr.mxu0 0.0
      %1819 = vmatpush1.msra.mxu0 0.0
      %1820 = vmatprep.subr.mxu0 0.0
      %1821 = vmatpush1.msra.mxu0 0.0
      %1822 = vmatprep.subr.mxu0 0.0
      %1823 = vmatpush1.msra.mxu0 0.0
      %1824 = vmatprep.subr.mxu0 0.0
      %1825 = vmatpush1.msra.mxu0 0.0
      %1826 = vmatprep.subr.mxu0 0.0
      %1827 = vmatpush1.msra.mxu0 0.0
      %1828 = vmatprep.subr.mxu0 0.0
      %1829 = vmatpush1.msra.mxu0 0.0
      %1830 = vmatprep.subr.mxu0 0.0
      %1831 = vmatpush1.msra.mxu0 0.0
      %1832 = vmatprep.subr.mxu0 0.0
      %1833 = vmatpush1.msra.mxu0 0.0
      %1834 = vmatprep.subr.mxu0 0.0
      %1835 = vmatpush1.msra.mxu0 0.0
      %1836 = vmatprep.mubr.f32.mxu0 0.0
      %1837 = vmatmul.mubr.f32.gmra.mrb[0].mxu0 %v1708
      %v1838 = vpop.f32.mrb[0].mxu0
      %v1839 = vadd.f32 0.0, %v1838
      %v1840 = vpop.f32.mrb[0].mxu0
      %1841 = vmatprep.mubr.f32.mxu0 0.0
      %1842 = vmatmul.mubr.f32.gmra.mrb[0].mxu0 %v1709
      %v1843 = vpop.f32.mrb[0].mxu0
      %v1844 = vadd.f32 0.0, %v1843
      %v1845 = vpop.f32.mrb[0].mxu0
      %1846 = vmatprep.mubr.f32.mxu0 0.0
      %1847 = vmatmul.mubr.f32.gmra.mrb[0].mxu0 %v1710
      %v1848 = vpop.f32.mrb[0].mxu0
      %v1849 = vadd.f32 0.0, %v1848
      %v1850 = vpop.f32.mrb[0].mxu0
      %1851 = vmatprep.mubr.f32.mxu0 0.0
      %1852 = vmatmul.mubr.f32.gmra.mrb[0].mxu0 %v1711
      %v1853 = vpop.f32.mrb[0].mxu0
      %v1854 = vadd.f32 0.0, %v1853
      %v1855 = vpop.f32.mrb[0].mxu0
      %1856 = vmatprep.mubr.f32.mxu0 0.0
      %1857 = vmatmul.mubr.f32.gmra.mrb[0].mxu0 %v1712
      %v1858 = vpop.f32.mrb[0].mxu0
      %v1859 = vadd.f32 0.0, %v1858
      %v1860 = vpop.f32.mrb[0].mxu0
      %1861 = vmatprep.mubr.f32.mxu0 0.0
      %1862 = vmatmul.mubr.f32.gmra.mrb[0].mxu0 %v1713
      %v1863 = vpop.f32.mrb[0].mxu0
      %v1864 = vadd.f32 0.0, %v1863
      %v1865 = vpop.f32.mrb[0].mxu0
      %1866 = vmatprep.mubr.f32.mxu0 0.0
      %1867 = vmatmul.mubr.f32.gmra.mrb[0].mxu0 %v1714
      %v1868 = vpop.f32.mrb[0].mxu0
      %v1869 = vadd.f32 0.0, %v1868
      %v1870 = vpop.f32.mrb[0].mxu0
      %1871 = vmatprep.mubr.f32.mxu0 0.0
      %1872 = vmatmul.mubr.f32.gmra.mrb[0].mxu0 %v1715
      %v1873 = vpop.f32.mrb[0].mxu0
      %v1874 = vadd.f32 0.0, %v1873
      %v1875 = vpop.f32.mrb[0].mxu0
      %1876 = vmatprep.mubr.f32.mxu0 0.0
      %1877 = vmatmul.mubr.f32.gmra.mrb[0].mxu0 %v1716
      %v1878 = vpop.f32.mrb[0].mxu0
      %v1879 = vadd.f32 0.0, %v1878
      %v1880 = vpop.f32.mrb[0].mxu0
      %1881 = vmatprep.mubr.f32.mxu0 0.0
      %1882 = vmatmul.mubr.f32.gmra.mrb[0].mxu0 %v1717
      %v1883 = vpop.f32.mrb[0].mxu0
      %v1884 = vadd.f32 0.0, %v1883
      %v1885 = vpop.f32.mrb[0].mxu0
      %1886 = vmatprep.mubr.f32.mxu0 0.0
      %1887 = vmatmul.mubr.f32.gmra.mrb[0].mxu0 %v1718
      %v1888 = vpop.f32.mrb[0].mxu0
      %v1889 = vadd.f32 0.0, %v1888
      %v1890 = vpop.f32.mrb[0].mxu0
      %1891 = vmatprep.mubr.f32.mxu0 0.0
      %1892 = vmatmul.mubr.f32.gmra.mrb[0].mxu0 %v1719
      %v1893 = vpop.f32.mrb[0].mxu0
      %v1894 = vadd.f32 0.0, %v1893
      %v1895 = vpop.f32.mrb[0].mxu0
      %1896 = vmatprep.mubr.f32.mxu0 0.0
      %1897 = vmatmul.mubr.f32.gmra.mrb[0].mxu0 %v1720
      %v1898 = vpop.f32.mrb[0].mxu0
      %v1899 = vadd.f32 0.0, %v1898
      %v1900 = vpop.f32.mrb[0].mxu0
      %1901 = vmatprep.mubr.f32.mxu0 0.0
      %1902 = vmatmul.mubr.f32.gmra.mrb[0].mxu0 %v1721
      %v1903 = vpop.f32.mrb[0].mxu0
      %v1904 = vadd.f32 0.0, %v1903
      %v1905 = vpop.f32.mrb[0].mxu0
      %1906 = vmatprep.mubr.f32.mxu0 0.0
      %1907 = vmatmul.mubr.f32.gmra.mrb[0].mxu0 %v1722
      %v1908 = vpop.f32.mrb[0].mxu0
      %v1909 = vadd.f32 0.0, %v1908
      %v1910 = vpop.f32.mrb[0].mxu0
      %1911 = vmatprep.mubr.f32.mxu0 0.0
      %1912 = vmatmul.mubr.f32.gmra.mrb[0].mxu0 %v1723
      %v1913 = vpop.f32.mrb[0].mxu0
      %v1914 = vadd.f32 0.0, %v1913
      %v1915 = vpop.f32.mrb[0].mxu0
      %1916 = vdwg.mxu0
      %1933 = vrot.lane.b32.xlu0 %v1839, 16
      %v1934 = vpop.permute.xlu0 %1933
      %1935 = vrot.lane.b32.xlu0 %v1844, 16
      %v1936 = vpop.permute.xlu0 %1935
      %1937 = vrot.lane.b32.xlu0 %v1849, 16
      %v1938 = vpop.permute.xlu0 %1937
      %1939 = vrot.lane.b32.xlu0 %v1854, 16
      %v1940 = vpop.permute.xlu0 %1939
      %1941 = vrot.lane.b32.xlu0 %v1859, 16
      %v1942 = vpop.permute.xlu0 %1941
      %1943 = vrot.lane.b32.xlu0 %v1864, 16
      %v1944 = vpop.permute.xlu0 %1943
      %1945 = vrot.lane.b32.xlu0 %v1869, 16
      %v1946 = vpop.permute.xlu0 %1945
      %1947 = vrot.lane.b32.xlu0 %v1874, 16
      %v1948 = vpop.permute.xlu0 %1947
      %1949 = vrot.lane.b32.xlu0 %v1879, 16
      %v1950 = vpop.permute.xlu0 %1949
      %1951 = vrot.lane.b32.xlu0 %v1884, 16
      %v1952 = vpop.permute.xlu0 %1951
      %1953 = vrot.lane.b32.xlu0 %v1889, 16
      %v1954 = vpop.permute.xlu0 %1953
      %1955 = vrot.lane.b32.xlu0 %v1894, 16
      %v1956 = vpop.permute.xlu0 %1955
      %1957 = vrot.lane.b32.xlu0 %v1899, 16
      %v1958 = vpop.permute.xlu0 %1957
      %1959 = vrot.lane.b32.xlu0 %v1904, 16
      %v1960 = vpop.permute.xlu0 %1959
      %1961 = vrot.lane.b32.xlu0 %v1909, 16
      %v1962 = vpop.permute.xlu0 %1961
      %1963 = vrot.lane.b32.xlu0 %v1914, 16
      %v1964 = vpop.permute.xlu0 %1963
      %v1981 = vsel %vm760, %v1229, %v1934
      %v1982 = vsel %vm760, %v1234, %v1936
      %v1983 = vsel %vm760, %v1239, %v1938
      %v1984 = vsel %vm760, %v1244, %v1940
      %v1985 = vsel %vm760, %v1249, %v1942
      %v1986 = vsel %vm760, %v1254, %v1944
      %v1987 = vsel %vm760, %v1259, %v1946
      %v1988 = vsel %vm760, %v1264, %v1948
      %v1989 = vsel %vm760, %v1269, %v1950
      %v1990 = vsel %vm760, %v1274, %v1952
      %v1991 = vsel %vm760, %v1279, %v1954
      %v1992 = vsel %vm760, %v1284, %v1956
      %v1993 = vsel %vm760, %v1289, %v1958
      %v1994 = vsel %vm760, %v1294, %v1960
      %v1995 = vsel %vm760, %v1299, %v1962
      %v1996 = vsel %vm760, %v1304, %v1964
      %v1997 = vld [vmem:[%s5] sm:$0xff]
      %v1998 = vld [vmem:[%s5 + $0x8] sm:$0xff]
      %v1999 = vld [vmem:[%s5 + $0x10] sm:$0xff]
      %v2000 = vld [vmem:[%s5 + $0x18] sm:$0xff]
      %v2001 = vld [vmem:[%s6] sm:$0x1]
      %v2003 = vlaneseq
      %v2004 = vshrl.u32 %v2003, 7
      %v2005 = vsub.s32 0, %v2004
      %v2006 = vrot.slane %v2001, %v2005
      %v2009 = vsel %vm454, %v1981, 0
      %v2012 = vsel %vm454, %v1982, 0
      %v2015 = vsel %vm454, %v1983, 0
      %v2018 = vsel %vm454, %v1984, 0
      %v2021 = vsel %vm454, %v1985, 0
      %v2024 = vsel %vm454, %v1986, 0
      %v2027 = vsel %vm454, %v1987, 0
      %v2030 = vsel %vm454, %v1988, 0
      %v2033 = vsel %vm454, %v1989, 0
      %v2036 = vsel %vm454, %v1990, 0
      %v2039 = vsel %vm454, %v1991, 0
      %v2042 = vsel %vm454, %v1992, 0
      %v2045 = vsel %vm454, %v1993, 0
      %v2048 = vsel %vm454, %v1994, 0
      %v2051 = vsel %vm454, %v1995, 0
      %v2054 = vsel %vm454, %v1996, 0
      %2056 = vmatprep.subr.mxu0 0.0
      %2057 = vmatpush1.msra.mxu0 %v1997
      %2058 = vmatprep.subr.mxu0 0.0
      %2059 = vmatpush1.msra.mxu0 %v1998
      %2060 = vmatprep.subr.mxu0 0.0
      %2061 = vmatpush1.msra.mxu0 %v1999
      %2062 = vmatprep.subr.mxu0 0.0
      %2063 = vmatpush1.msra.mxu0 %v2000
      %2064 = vmatprep.subr.mxu0 0.0
      %2065 = vmatpush1.msra.mxu0 0.0
      %2066 = vmatprep.subr.mxu0 0.0
      %2067 = vmatpush1.msra.mxu0 0.0
      %2068 = vmatprep.subr.mxu0 0.0
      %2069 = vmatpush1.msra.mxu0 0.0
      %2070 = vmatprep.subr.mxu0 0.0
      %2071 = vmatpush1.msra.mxu0 0.0
      %2072 = vmatprep.subr.mxu0 0.0
      %2073 = vmatpush1.msra.mxu0 0.0
      %2074 = vmatprep.subr.mxu0 0.0
      %2075 = vmatpush1.msra.mxu0 0.0
      %2076 = vmatprep.subr.mxu0 0.0
      %2077 = vmatpush1.msra.mxu0 0.0
      %2078 = vmatprep.subr.mxu0 0.0
      %2079 = vmatpush1.msra.mxu0 0.0
      %2080 = vmatprep.subr.mxu0 0.0
      %2081 = vmatpush1.msra.mxu0 0.0
      %2082 = vmatprep.subr.mxu0 0.0
      %2083 = vmatpush1.msra.mxu0 0.0
      %2084 = vmatprep.subr.mxu0 0.0
      %2085 = vmatpush1.msra.mxu0 0.0
      %2086 = vmatprep.subr.mxu0 0.0
      %2087 = vmatpush1.msra.mxu0 0.0
      %2088 = vmatprep.subr.mxu0 0.0
      %2089 = vmatpush1.msra.mxu0 0.0
      %2090 = vmatprep.subr.mxu0 0.0
      %2091 = vmatpush1.msra.mxu0 0.0
      %2092 = vmatprep.subr.mxu0 0.0
      %2093 = vmatpush1.msra.mxu0 0.0
      %2094 = vmatprep.subr.mxu0 0.0
      %2095 = vmatpush1.msra.mxu0 0.0
      %2096 = vmatprep.subr.mxu0 0.0
      %2097 = vmatpush1.msra.mxu0 0.0
      %2098 = vmatprep.subr.mxu0 0.0
      %2099 = vmatpush1.msra.mxu0 0.0
      %2100 = vmatprep.subr.mxu0 0.0
      %2101 = vmatpush1.msra.mxu0 0.0
      %2102 = vmatprep.subr.mxu0 0.0
      %2103 = vmatpush1.msra.mxu0 0.0
      %2104 = vmatprep.subr.mxu0 0.0
      %2105 = vmatpush1.msra.mxu0 0.0
      %2106 = vmatprep.subr.mxu0 0.0
      %2107 = vmatpush1.msra.mxu0 0.0
      %2108 = vmatprep.subr.mxu0 0.0
      %2109 = vmatpush1.msra.mxu0 0.0
      %2110 = vmatprep.subr.mxu0 0.0
      %2111 = vmatpush1.msra.mxu0 0.0
      %2112 = vmatprep.subr.mxu0 0.0
      %2113 = vmatpush1.msra.mxu0 0.0
      %2114 = vmatprep.subr.mxu0 0.0
      %2115 = vmatpush1.msra.mxu0 0.0
      %2116 = vmatprep.subr.mxu0 0.0
      %2117 = vmatpush1.msra.mxu0 0.0
      %2118 = vmatprep.subr.mxu0 0.0
      %2119 = vmatpush1.msra.mxu0 0.0
      %2120 = vmatprep.mubr.f32.mxu0 0.0
      %2121 = vmatmul.mubr.f32.gmra.mrb[0].mxu0 %v2009
      %v2122 = vpop.f32.mrb[0].mxu0
      %v2123 = vadd.f32 %v2006, %v2122
      %v2124 = vpop.f32.mrb[0].mxu0
      %2125 = vmatprep.mubr.f32.mxu0 0.0
      %2126 = vmatmul.mubr.f32.gmra.mrb[0].mxu0 %v2012
      %v2127 = vpop.f32.mrb[0].mxu0
      %v2128 = vadd.f32 %v2006, %v2127
      %v2129 = vpop.f32.mrb[0].mxu0
      %2130 = vmatprep.mubr.f32.mxu0 0.0
      %2131 = vmatmul.mubr.f32.gmra.mrb[0].mxu0 %v2015
      %v2132 = vpop.f32.mrb[0].mxu0
      %v2133 = vadd.f32 %v2006, %v2132
      %v2134 = vpop.f32.mrb[0].mxu0
      %2135 = vmatprep.mubr.f32.mxu0 0.0
      %2136 = vmatmul.mubr.f32.gmra.mrb[0].mxu0 %v2018
      %v2137 = vpop.f32.mrb[0].mxu0
      %v2138 = vadd.f32 %v2006, %v2137
      %v2139 = vpop.f32.mrb[0].mxu0
      %2140 = vmatprep.mubr.f32.mxu0 0.0
      %2141 = vmatmul.mubr.f32.gmra.mrb[0].mxu0 %v2021
      %v2142 = vpop.f32.mrb[0].mxu0
      %v2143 = vadd.f32 %v2006, %v2142
      %v2144 = vpop.f32.mrb[0].mxu0
      %2145 = vmatprep.mubr.f32.mxu0 0.0
      %2146 = vmatmul.mubr.f32.gmra.mrb[0].mxu0 %v2024
      %v2147 = vpop.f32.mrb[0].mxu0
      %v2148 = vadd.f32 %v2006, %v2147
      %v2149 = vpop.f32.mrb[0].mxu0
      %2150 = vmatprep.mubr.f32.mxu0 0.0
      %2151 = vmatmul.mubr.f32.gmra.mrb[0].mxu0 %v2027
      %v2152 = vpop.f32.mrb[0].mxu0
      %v2153 = vadd.f32 %v2006, %v2152
      %v2154 = vpop.f32.mrb[0].mxu0
      %2155 = vmatprep.mubr.f32.mxu0 0.0
      %2156 = vmatmul.mubr.f32.gmra.mrb[0].mxu0 %v2030
      %v2157 = vpop.f32.mrb[0].mxu0
      %v2158 = vadd.f32 %v2006, %v2157
      %v2159 = vpop.f32.mrb[0].mxu0
      %2160 = vmatprep.mubr.f32.mxu0 0.0
      %2161 = vmatmul.mubr.f32.gmra.mrb[0].mxu0 %v2033
      %v2162 = vpop.f32.mrb[0].mxu0
      %v2163 = vadd.f32 %v2006, %v2162
      %v2164 = vpop.f32.mrb[0].mxu0
      %2165 = vmatprep.mubr.f32.mxu0 0.0
      %2166 = vmatmul.mubr.f32.gmra.mrb[0].mxu0 %v2036
      %v2167 = vpop.f32.mrb[0].mxu0
      %v2168 = vadd.f32 %v2006, %v2167
      %v2169 = vpop.f32.mrb[0].mxu0
      %2170 = vmatprep.mubr.f32.mxu0 0.0
      %2171 = vmatmul.mubr.f32.gmra.mrb[0].mxu0 %v2039
      %v2172 = vpop.f32.mrb[0].mxu0
      %v2173 = vadd.f32 %v2006, %v2172
      %v2174 = vpop.f32.mrb[0].mxu0
      %2175 = vmatprep.mubr.f32.mxu0 0.0
      %2176 = vmatmul.mubr.f32.gmra.mrb[0].mxu0 %v2042
      %v2177 = vpop.f32.mrb[0].mxu0
      %v2178 = vadd.f32 %v2006, %v2177
      %v2179 = vpop.f32.mrb[0].mxu0
      %2180 = vmatprep.mubr.f32.mxu0 0.0
      %2181 = vmatmul.mubr.f32.gmra.mrb[0].mxu0 %v2045
      %v2182 = vpop.f32.mrb[0].mxu0
      %v2183 = vadd.f32 %v2006, %v2182
      %v2184 = vpop.f32.mrb[0].mxu0
      %2185 = vmatprep.mubr.f32.mxu0 0.0
      %2186 = vmatmul.mubr.f32.gmra.mrb[0].mxu0 %v2048
      %v2187 = vpop.f32.mrb[0].mxu0
      %v2188 = vadd.f32 %v2006, %v2187
      %v2189 = vpop.f32.mrb[0].mxu0
      %2190 = vmatprep.mubr.f32.mxu0 0.0
      %2191 = vmatmul.mubr.f32.gmra.mrb[0].mxu0 %v2051
      %v2192 = vpop.f32.mrb[0].mxu0
      %v2193 = vadd.f32 %v2006, %v2192
      %v2194 = vpop.f32.mrb[0].mxu0
      %2195 = vmatprep.mubr.f32.mxu0 0.0
      %2196 = vmatmul.mubr.f32.gmra.mrb[0].mxu0 %v2054
      %v2197 = vpop.f32.mrb[0].mxu0
      %v2198 = vadd.f32 %v2006, %v2197
      %v2199 = vpop.f32.mrb[0].mxu0
      %2200 = vdwg.mxu0
      %v2201 = vmax.f32 %v2123, 0.0
      %v2202 = vmax.f32 %v2128, 0.0
      %v2203 = vmax.f32 %v2133, 0.0
      %v2204 = vmax.f32 %v2138, 0.0
      %v2205 = vmax.f32 %v2143, 0.0
      %v2206 = vmax.f32 %v2148, 0.0
      %v2207 = vmax.f32 %v2153, 0.0
      %v2208 = vmax.f32 %v2158, 0.0
      %v2209 = vmax.f32 %v2163, 0.0
      %v2210 = vmax.f32 %v2168, 0.0
      %v2211 = vmax.f32 %v2173, 0.0
      %v2212 = vmax.f32 %v2178, 0.0
      %v2213 = vmax.f32 %v2183, 0.0
      %v2214 = vmax.f32 %v2188, 0.0
      %v2215 = vmax.f32 %v2193, 0.0
      %v2216 = vmax.f32 %v2198, 0.0
      %v2217 = vld [vmem:[%s7] sm:$0xff]
      %v2218 = vld [vmem:[%s7 + $0x8] sm:$0xff]
      %v2219 = vld [vmem:[%s7 + $0x10] sm:$0xff]
      %v2220 = vld [vmem:[%s7 + $0x18] sm:$0xff]
      %v2221 = vld [vmem:[%s8] sm:$0x1]
      %v2223 = vlaneseq
      %v2224 = vshrl.u32 %v2223, 7
      %v2225 = vsub.s32 0, %v2224
      %v2226 = vrot.slane %v2221, %v2225
      %v2229 = vsel %vm454, %v2201, 0
      %v2232 = vsel %vm454, %v2202, 0
      %v2235 = vsel %vm454, %v2203, 0
      %v2238 = vsel %vm454, %v2204, 0
      %v2241 = vsel %vm454, %v2205, 0
      %v2244 = vsel %vm454, %v2206, 0
      %v2247 = vsel %vm454, %v2207, 0
      %v2250 = vsel %vm454, %v2208, 0
      %v2253 = vsel %vm454, %v2209, 0
      %v2256 = vsel %vm454, %v2210, 0
      %v2259 = vsel %vm454, %v2211, 0
      %v2262 = vsel %vm454, %v2212, 0
      %v2265 = vsel %vm454, %v2213, 0
      %v2268 = vsel %vm454, %v2214, 0
      %v2271 = vsel %vm454, %v2215, 0
      %v2274 = vsel %vm454, %v2216, 0
      %2276 = vmatprep.subr.mxu0 0.0
      %2277 = vmatpush1.msra.mxu0 %v2217
      %2278 = vmatprep.subr.mxu0 0.0
      %2279 = vmatpush1.msra.mxu0 %v2218
      %2280 = vmatprep.subr.mxu0 0.0
      %2281 = vmatpush1.msra.mxu0 %v2219
      %2282 = vmatprep.subr.mxu0 0.0
      %2283 = vmatpush1.msra.mxu0 %v2220
      %2284 = vmatprep.subr.mxu0 0.0
      %2285 = vmatpush1.msra.mxu0 0.0
      %2286 = vmatprep.subr.mxu0 0.0
      %2287 = vmatpush1.msra.mxu0 0.0
      %2288 = vmatprep.subr.mxu0 0.0
      %2289 = vmatpush1.msra.mxu0 0.0
      %2290 = vmatprep.subr.mxu0 0.0
      %2291 = vmatpush1.msra.mxu0 0.0
      %2292 = vmatprep.subr.mxu0 0.0
      %2293 = vmatpush1.msra.mxu0 0.0
      %2294 = vmatprep.subr.mxu0 0.0
      %2295 = vmatpush1.msra.mxu0 0.0
      %2296 = vmatprep.subr.mxu0 0.0
      %2297 = vmatpush1.msra.mxu0 0.0
      %2298 = vmatprep.subr.mxu0 0.0
      %2299 = vmatpush1.msra.mxu0 0.0
      %2300 = vmatprep.subr.mxu0 0.0
      %2301 = vmatpush1.msra.mxu0 0.0
      %2302 = vmatprep.subr.mxu0 0.0
      %2303 = vmatpush1.msra.mxu0 0.0
      %2304 = vmatprep.subr.mxu0 0.0
      %2305 = vmatpush1.msra.mxu0 0.0
      %2306 = vmatprep.subr.mxu0 0.0
      %2307 = vmatpush1.msra.mxu0 0.0
      %2308 = vmatprep.subr.mxu0 0.0
      %2309 = vmatpush1.msra.mxu0 0.0
      %2310 = vmatprep.subr.mxu0 0.0
      %2311 = vmatpush1.msra.mxu0 0.0
      %2312 = vmatprep.subr.mxu0 0.0
      %2313 = vmatpush1.msra.mxu0 0.0
      %2314 = vmatprep.subr.mxu0 0.0
      %2315 = vmatpush1.msra.mxu0 0.0
      %2316 = vmatprep.subr.mxu0 0.0
      %2317 = vmatpush1.msra.mxu0 0.0
      %2318 = vmatprep.subr.mxu0 0.0
      %2319 = vmatpush1.msra.mxu0 0.0
      %2320 = vmatprep.subr.mxu0 0.0
      %2321 = vmatpush1.msra.mxu0 0.0
      %2322 = vmatprep.subr.mxu0 0.0
      %2323 = vmatpush1.msra.mxu0 0.0
      %2324 = vmatprep.subr.mxu0 0.0
      %2325 = vmatpush1.msra.mxu0 0.0
      %2326 = vmatprep.subr.mxu0 0.0
      %2327 = vmatpush1.msra.mxu0 0.0
      %2328 = vmatprep.subr.mxu0 0.0
      %2329 = vmatpush1.msra.mxu0 0.0
      %2330 = vmatprep.subr.mxu0 0.0
      %2331 = vmatpush1.msra.mxu0 0.0
      %2332 = vmatprep.subr.mxu0 0.0
      %2333 = vmatpush1.msra.mxu0 0.0
      %2334 = vmatprep.subr.mxu0 0.0
      %2335 = vmatpush1.msra.mxu0 0.0
      %2336 = vmatprep.subr.mxu0 0.0
      %2337 = vmatpush1.msra.mxu0 0.0
      %2338 = vmatprep.subr.mxu0 0.0
      %2339 = vmatpush1.msra.mxu0 0.0
      %2340 = vmatprep.mubr.f32.mxu0 0.0
      %2341 = vmatmul.mubr.f32.gmra.mrb[0].mxu0 %v2229
      %v2342 = vpop.f32.mrb[0].mxu0
      %v2343 = vadd.f32 %v2226, %v2342
      %v2344 = vpop.f32.mrb[0].mxu0
      %2345 = vmatprep.mubr.f32.mxu0 0.0
      %2346 = vmatmul.mubr.f32.gmra.mrb[0].mxu0 %v2232
      %v2347 = vpop.f32.mrb[0].mxu0
      %v2348 = vadd.f32 %v2226, %v2347
      %v2349 = vpop.f32.mrb[0].mxu0
      %2350 = vmatprep.mubr.f32.mxu0 0.0
      %2351 = vmatmul.mubr.f32.gmra.mrb[0].mxu0 %v2235
      %v2352 = vpop.f32.mrb[0].mxu0
      %v2353 = vadd.f32 %v2226, %v2352
      %v2354 = vpop.f32.mrb[0].mxu0
      %2355 = vmatprep.mubr.f32.mxu0 0.0
      %2356 = vmatmul.mubr.f32.gmra.mrb[0].mxu0 %v2238
      %v2357 = vpop.f32.mrb[0].mxu0
      %v2358 = vadd.f32 %v2226, %v2357
      %v2359 = vpop.f32.mrb[0].mxu0
      %2360 = vmatprep.mubr.f32.mxu0 0.0
      %2361 = vmatmul.mubr.f32.gmra.mrb[0].mxu0 %v2241
      %v2362 = vpop.f32.mrb[0].mxu0
      %v2363 = vadd.f32 %v2226, %v2362
      %v2364 = vpop.f32.mrb[0].mxu0
      %2365 = vmatprep.mubr.f32.mxu0 0.0
      %2366 = vmatmul.mubr.f32.gmra.mrb[0].mxu0 %v2244
      %v2367 = vpop.f32.mrb[0].mxu0
      %v2368 = vadd.f32 %v2226, %v2367
      %v2369 = vpop.f32.mrb[0].mxu0
      %2370 = vmatprep.mubr.f32.mxu0 0.0
      %2371 = vmatmul.mubr.f32.gmra.mrb[0].mxu0 %v2247
      %v2372 = vpop.f32.mrb[0].mxu0
      %v2373 = vadd.f32 %v2226, %v2372
      %v2374 = vpop.f32.mrb[0].mxu0
      %2375 = vmatprep.mubr.f32.mxu0 0.0
      %2376 = vmatmul.mubr.f32.gmra.mrb[0].mxu0 %v2250
      %v2377 = vpop.f32.mrb[0].mxu0
      %v2378 = vadd.f32 %v2226, %v2377
      %v2379 = vpop.f32.mrb[0].mxu0
      %2380 = vmatprep.mubr.f32.mxu0 0.0
      %2381 = vmatmul.mubr.f32.gmra.mrb[0].mxu0 %v2253
      %v2382 = vpop.f32.mrb[0].mxu0
      %v2383 = vadd.f32 %v2226, %v2382
      %v2384 = vpop.f32.mrb[0].mxu0
      %2385 = vmatprep.mubr.f32.mxu0 0.0
      %2386 = vmatmul.mubr.f32.gmra.mrb[0].mxu0 %v2256
      %v2387 = vpop.f32.mrb[0].mxu0
      %v2388 = vadd.f32 %v2226, %v2387
      %v2389 = vpop.f32.mrb[0].mxu0
      %2390 = vmatprep.mubr.f32.mxu0 0.0
      %2391 = vmatmul.mubr.f32.gmra.mrb[0].mxu0 %v2259
      %v2392 = vpop.f32.mrb[0].mxu0
      %v2393 = vadd.f32 %v2226, %v2392
      %v2394 = vpop.f32.mrb[0].mxu0
      %2395 = vmatprep.mubr.f32.mxu0 0.0
      %2396 = vmatmul.mubr.f32.gmra.mrb[0].mxu0 %v2262
      %v2397 = vpop.f32.mrb[0].mxu0
      %v2398 = vadd.f32 %v2226, %v2397
      %v2399 = vpop.f32.mrb[0].mxu0
      %2400 = vmatprep.mubr.f32.mxu0 0.0
      %2401 = vmatmul.mubr.f32.gmra.mrb[0].mxu0 %v2265
      %v2402 = vpop.f32.mrb[0].mxu0
      %v2403 = vadd.f32 %v2226, %v2402
      %v2404 = vpop.f32.mrb[0].mxu0
      %2405 = vmatprep.mubr.f32.mxu0 0.0
      %2406 = vmatmul.mubr.f32.gmra.mrb[0].mxu0 %v2268
      %v2407 = vpop.f32.mrb[0].mxu0
      %v2408 = vadd.f32 %v2226, %v2407
      %v2409 = vpop.f32.mrb[0].mxu0
      %2410 = vmatprep.mubr.f32.mxu0 0.0
      %2411 = vmatmul.mubr.f32.gmra.mrb[0].mxu0 %v2271
      %v2412 = vpop.f32.mrb[0].mxu0
      %v2413 = vadd.f32 %v2226, %v2412
      %v2414 = vpop.f32.mrb[0].mxu0
      %2415 = vmatprep.mubr.f32.mxu0 0.0
      %2416 = vmatmul.mubr.f32.gmra.mrb[0].mxu0 %v2274
      %v2417 = vpop.f32.mrb[0].mxu0
      %v2418 = vadd.f32 %v2226, %v2417
      %v2419 = vpop.f32.mrb[0].mxu0
      %2420 = vdwg.mxu0
      %2421 = vst.msk [vmem:[%s356] sm:$0xff] %vm454, %v2343
      %2422 = vst.msk [vmem:[%s356 + $0x8] sm:$0xff] %vm454, %v2348
      %2423 = vst.msk [vmem:[%s356 + $0x10] sm:$0xff] %vm454, %v2353
      %2424 = vst.msk [vmem:[%s356 + $0x18] sm:$0xff] %vm454, %v2358
      %2425 = vst.msk [vmem:[%s356 + $0x20] sm:$0xff] %vm454, %v2363
      %2426 = vst.msk [vmem:[%s356 + $0x28] sm:$0xff] %vm454, %v2368
      %2427 = vst.msk [vmem:[%s356 + $0x30] sm:$0xff] %vm454, %v2373
      %2428 = vst.msk [vmem:[%s356 + $0x38] sm:$0xff] %vm454, %v2378
      %2429 = vst.msk [vmem:[%s356 + $0x40] sm:$0xff] %vm454, %v2383
      %2430 = vst.msk [vmem:[%s356 + $0x48] sm:$0xff] %vm454, %v2388
      %2431 = vst.msk [vmem:[%s356 + $0x50] sm:$0xff] %vm454, %v2393
      %2432 = vst.msk [vmem:[%s356 + $0x58] sm:$0xff] %vm454, %v2398
      %2433 = vst.msk [vmem:[%s356 + $0x60] sm:$0xff] %vm454, %v2403
      %2434 = vst.msk [vmem:[%s356 + $0x68] sm:$0xff] %vm454, %v2408
      %2435 = vst.msk [vmem:[%s356 + $0x70] sm:$0xff] %vm454, %v2413
      %2436 = vst.msk [vmem:[%s356 + $0x78] sm:$0xff] %vm454, %v2418
      %s2437 = smul.u32 16, %s20
      %p2438 = scmp.lt.s32.totalorder %s2437, 63
      %s2439 = scalar_select %p2438, %s2437, 63
      %s2440 = smul.addr %s2439, 8
      %s2441 = scalar_lea.vmem %s9, %s2440
      // Predicated region
      $region57: #{tpu_custom_call.1} parent=55 // pred_check
        %p2442 = pneg %p237
      $region58: #{tpu_custom_call.1} parent=55 // pred_check_branch
        %2444 = sbr.rel (%p2442) target = $region60
      $region59: #{tpu_custom_call.1} parent=55 // pred_region
        %s2445 = smul.u32 16, %s20
      $region60: #{tpu_custom_call.1} parent=55 // pred_fallthru
        _
    $region56: #{tpu_custom_call.1} parent=5 // pred_fallthru
      _
    %p2446 = scmp.le.s32.totalorder 2, %s15
    // Predicated region
    $region61: #{tpu_custom_call.1} parent=5 // pred_check
      %p2447 = pneg %p2446
    $region62: #{tpu_custom_call.1} parent=5 // pred_check_branch
      %2449 = sbr.rel (%p2447) target = $region64
    $region63: #{tpu_custom_call.1} parent=5 // pred_region
      %s2450 = ssub.s32 %s15, 2
      // Predicated region
      $region65: #{tpu_custom_call.1} parent=63 // pred_check
        %p2451 = pneg %p243
      $region66: #{tpu_custom_call.1} parent=63 // pred_check_branch
        %2453 = sbr.rel (%p2451) target = $region68
      $region67: #{tpu_custom_call.1} parent=63 // pred_region
        %s2454 = smul.u32 16, %s21
        %p2455 = scmp.lt.s32.totalorder %s2454, 63
        %s2456 = scalar_select %p2455, %s2454, 63
        %s2457 = smul.addr %s2456, 8
        %s2458 = scalar_lea.vmem %s9, %s2457
      $region68: #{tpu_custom_call.1} parent=63 // pred_fallthru
        _
    $region64: #{tpu_custom_call.1} parent=5 // pred_fallthru
      _
  $region6: #{tpu_custom_call.1} parent=0 // loop_footer
    %s19 = sadd.s32 1, %s15
  $region7: #{tpu_custom_call.1} parent=0 // loop_footer_branch
    %14 = sbr.rel target = $region3
  $region8: #{tpu_custom_call.1} parent=0 // loop_exit
    _

</llo_original>
